<compile_context>
chip_gen: v7x
topology: tpu7x:2x2x1
jax: 0.10.0
libtpu: 0.0.40
codegen_flags: <defaults>
</compile_context>

<pallas_src>
import jax
import jax.numpy as jnp
from jax import lax
from jax.experimental import pallas as pl
from jax.experimental.pallas import tpu as pltpu

VMEM_SPEC = pl.BlockSpec(memory_space=pltpu.MemorySpace.VMEM)
_NEG = -1e30  # finite "minus infinity" so 0 * logp stays finite for padded lanes


def _mm(a, b):
    """MXU matmul, bf16 inputs / f32 accumulation."""
    return jnp.dot(a.astype(jnp.bfloat16), b.astype(jnp.bfloat16),
                   preferred_element_type=jnp.float32)


def _mm_rhs_t(a, b):
    """[M,K] x [N,K] -> [M,N] (contract last dims), bf16 inputs / f32 acc."""
    return lax.dot_general(a.astype(jnp.bfloat16), b.astype(jnp.bfloat16),
                           (((1,), (1,)), ((), ())),
                           preferred_element_type=jnp.float32)


# ------------------------------ fused kernel --------------------------------

def make_leopard_kernel(num_classes, padded_classes, vocab):
    def kernel(embed_ref,
               te_cq_ids_ref, te_cq_mask_ref, te_ans_ids_ref, te_ans_mask_ref,
               te_labels_ref,
               cq_ids_ref, cq_mask_ref, labels_ref,
               te_w1cq_ref, te_w1ans_ref, te_b1_ref, te_w2_ref, te_b2_ref,
               wg_w1_ref, wg_b1_ref, wg_w2w_ref, wg_b2w_ref,
               wg_w2bt_ref, wg_b2b_ref,
               q_w_ref, q_b_ref,
               logits_ref, loss_ref):
        emb_tbl = embed_ref[...]                                    # [V, H]

        def pooled(ids_ref, mask_ref):
            # Fused embedding-gather + masked-mean pooling:
            #   sum_s mask[b,s] * embed[ids[b,s]]  ==  (masked one-hot) @ embed
            ids = ids_ref[...]                                      # [N, S] i32
            mask = mask_ref[...]                                    # [N, S] f32
            n, s = ids.shape
            oh = (ids[:, :, None] ==
                  lax.broadcasted_iota(jnp.int32, (n, s, vocab), 2)
                  ).astype(jnp.float32)                             # [N, S, V]
            m = jnp.sum(oh * mask[:, :, None], axis=1)              # [N, V]
            cnt = jnp.sum(mask, axis=1, keepdims=True)              # [N, 1]
            inv = pl.reciprocal(jnp.maximum(cnt, 1e-6), approx=True)
            return _mm(m, emb_tbl) * inv                            # [N, H]

        # ---- SingleTaskEmbedding on the te batch -> task embeddings [Bt, E] --
        cq_pool = pooled(te_cq_ids_ref, te_cq_mask_ref)
        ans_pool = pooled(te_ans_ids_ref, te_ans_mask_ref)
        h = jnp.tanh(_mm(cq_pool, te_w1cq_ref[...]) +
                     _mm(ans_pool, te_w1ans_ref[...]) + te_b1_ref[...])
        task_embs = _mm(h, te_w2_ref[...]) + te_b2_ref[...]         # [Bt, E]

        # ---- partition_by_labels(...).mean(0): normalized one-hot matmul -----
        # Classes with zero support end up with a zero class embedding.
        te_lbl = te_labels_ref[...]                                 # [1, Bt]
        bt = te_lbl.shape[1]
        oh_cls = (lax.broadcasted_iota(jnp.int32, (padded_classes, bt), 0) ==
                  te_lbl).astype(jnp.float32)                       # [Cp, Bt]
        cnt_cls = jnp.sum(oh_cls, axis=1, keepdims=True)
        oh_cls = oh_cls * pl.reciprocal(jnp.maximum(cnt_cls, 1.0), approx=True)
        class_emb = _mm(oh_cls, task_embs)                          # [Cp, E]

        # ---- ParameterGenerator: per-class weight rows + biases ---------------
        hg = jnp.maximum(_mm(class_emb, wg_w1_ref[...]) + wg_b1_ref[...], 0.0)
        gen_w = _mm(hg, wg_w2w_ref[...]) + wg_b2w_ref[...]          # [Cp, H]
        gen_b = _mm_rhs_t(wg_w2bt_ref[...], hg) + wg_b2b_ref[...]   # [1, Cp]

        # ---- bart_model stand-in query encoder -------------------------------
        q_pool = pooled(cq_ids_ref, cq_mask_ref)
        feat = jnp.tanh(_mm(q_pool, q_w_ref[...]) + q_b_ref[...])   # [B, H]

        # ---- classifier head with generated weights + cross-entropy ----------
        b = feat.shape[0]
        pad_mask = jnp.where(
            lax.broadcasted_iota(jnp.int32, (1, padded_classes), 1) < num_classes,
            0.0, _NEG)                                              # [1, Cp]
        logits = _mm_rhs_t(feat, gen_w) + gen_b + pad_mask          # [B, Cp]
        logits_ref[...] = logits                                    # lane-dense

        lbl = labels_ref[...]                                       # [B, 1]
        oh_lbl = (lax.broadcasted_iota(jnp.int32, (b, padded_classes), 1) ==
                  lbl).astype(jnp.float32)                          # [B, Cp]
        mx = jnp.max(logits, axis=-1, keepdims=True)
        sh = logits - mx
        se = jnp.sum(jnp.exp(sh), axis=-1, keepdims=True)
        logp = sh - jnp.log(se)
        nll = -jnp.sum(oh_lbl * logp, axis=-1, keepdims=True)       # [B, 1]
        loss_ref[...] = jnp.mean(nll, axis=(0, 1), keepdims=True)   # [1, 1]

    return kernel


# --------------------------- parameters / wrapper ---------------------------

def init_params(key, V=64, H=32, E=32, G=64):
    ks = jax.random.split(key, 6)
    scale = 0.02
    return {
        "embed": jax.random.normal(ks[0], (V, H), jnp.float32) * scale,
        # SingleTaskEmbedding
        "te_w1": jax.random.normal(ks[1], (2 * H, E), jnp.float32) * scale,
        "te_b1": jnp.zeros((1, E), jnp.float32),
        "te_w2": jax.random.normal(ks[2], (E, E), jnp.float32) * scale,
        "te_b2": jnp.zeros((1, E), jnp.float32),
        # ParameterGenerator (emits H weights + 1 bias per class)
        "wg_w1": jax.random.normal(ks[3], (E, G), jnp.float32) * scale,
        "wg_b1": jnp.zeros((1, G), jnp.float32),
        "wg_w2": jax.random.normal(ks[4], (G, H + 1), jnp.float32) * scale,
        "wg_b2": jnp.zeros((1, H + 1), jnp.float32),
        # bart_model stand-in query encoder
        "q_w": jax.random.normal(ks[5], (H, H), jnp.float32) * scale,
        "q_b": jnp.zeros((1, H), jnp.float32),
    }


def leopard_forward(params, cq_input, cq_mask, ans_input, ans_mask, labels,
                    te_cq_input, te_cq_mask, te_ans_input, te_ans_mask,
                    te_labels, num_classes):
    del ans_input, ans_mask  # the reference sets them to None on the query path
    V, H = params["embed"].shape
    B = cq_input.shape[0]
    Cp = max(128, ((num_classes + 127) // 128) * 128)  # lane-dense class dim

    # Trace-time re-slicing of parameters (tiny, constant-shaped).
    te_w1_cq = params["te_w1"][:H]          # [H, E]
    te_w1_ans = params["te_w1"][H:]         # [H, E]
    wg_w2_w = params["wg_w2"][:, :H]        # [G, H]
    wg_w2_bt = params["wg_w2"][:, H:].T     # [1, G]
    wg_b2_w = params["wg_b2"][:, :H]        # [1, H]
    wg_b2_b = params["wg_b2"][:, H:]        # [1, 1]

    kernel = make_leopard_kernel(num_classes, Cp, V)
    args = (params["embed"],
            te_cq_input, te_cq_mask, te_ans_input, te_ans_mask,
            te_labels.reshape(1, -1).astype(jnp.int32),
            cq_input, cq_mask, labels.reshape(-1, 1).astype(jnp.int32),
            te_w1_cq, te_w1_ans, params["te_b1"], params["te_w2"],
            params["te_b2"],
            params["wg_w1"], params["wg_b1"], wg_w2_w, wg_b2_w,
            wg_w2_bt, wg_b2_b,
            params["q_w"], params["q_b"])

    logits_pad, loss = pl.pallas_call(
        kernel,
        out_shape=(jax.ShapeDtypeStruct((B, Cp), jnp.float32),
                   jax.ShapeDtypeStruct((1, 1), jnp.float32)),
        in_specs=[VMEM_SPEC] * len(args),
        out_specs=(VMEM_SPEC, VMEM_SPEC),
    )(*args)

    # TODO(synk): `higher` inner-loop SGD / autograd.grad / .backward() are
    # host-side training machinery with no Pallas forward-kernel equivalent.
    return loss[0, 0], logits_pad[:, :num_classes]


# ---------------------------------- main ------------------------------------

if __name__ == "__main__":
    B, Bt, S, V, C = 8, 8, 8, 64, 2

    key = jax.random.PRNGKey(0)
    kp, k1, k2, k3, k4, k5 = jax.random.split(key, 6)
    params = init_params(kp, V=V)

    # query batch (cq_input, cq_attention_masks, ans_*, labels)
    cq_input = jax.random.randint(k1, (B, S), 0, V, dtype=jnp.int32)
    cq_mask = jnp.ones((B, S), jnp.float32)
    ans_input = jax.random.randint(k2, (B, S), 0, V, dtype=jnp.int32)
    ans_mask = jnp.ones((B, S), jnp.float32)
    labels = jax.random.randint(k3, (B,), 0, C, dtype=jnp.int32)

    # "dataloader.sample_batch_from_task" stand-in (deterministic te batch)
    te_cq_input = jax.random.randint(k4, (Bt, S), 0, V, dtype=jnp.int32)
    te_cq_mask = jnp.ones((Bt, S), jnp.float32)
    te_ans_input = jax.random.randint(k5, (Bt, S), 0, V, dtype=jnp.int32)
    te_ans_mask = jnp.ones((Bt, S), jnp.float32)
    te_labels = jnp.arange(Bt, dtype=jnp.int32) % C  # both classes present

    fwd = jax.jit(leopard_forward, static_argnums=(11,))
    loss, logits = fwd(params, cq_input, cq_mask, ans_input, ans_mask, labels,
                       te_cq_input, te_cq_mask, te_ans_input, te_ans_mask,
                       te_labels, C)
    jax.block_until_ready((loss, logits))
    print("KERNEL_OK")
</pallas_src>

<mosaic_0001>
module attributes {stable_mosaic.version = 11 : i64} {
  func.func @kernel(%arg0: memref<64x32xf32, #tpu.memory_space<vmem>>, %arg1: memref<8x8xi32, #tpu.memory_space<vmem>>, %arg2: memref<8x8xf32, #tpu.memory_space<vmem>>, %arg3: memref<8x8xi32, #tpu.memory_space<vmem>>, %arg4: memref<8x8xf32, #tpu.memory_space<vmem>>, %arg5: memref<1x8xi32, #tpu.memory_space<vmem>>, %arg6: memref<8x8xi32, #tpu.memory_space<vmem>>, %arg7: memref<8x8xf32, #tpu.memory_space<vmem>>, %arg8: memref<8x1xi32, #tpu.memory_space<vmem>>, %arg9: memref<32x32xf32, #tpu.memory_space<vmem>>, %arg10: memref<32x32xf32, #tpu.memory_space<vmem>>, %arg11: memref<1x32xf32, #tpu.memory_space<vmem>>, %arg12: memref<32x32xf32, #tpu.memory_space<vmem>>, %arg13: memref<1x32xf32, #tpu.memory_space<vmem>>, %arg14: memref<32x64xf32, #tpu.memory_space<vmem>>, %arg15: memref<1x64xf32, #tpu.memory_space<vmem>>, %arg16: memref<64x32xf32, #tpu.memory_space<vmem>>, %arg17: memref<1x32xf32, #tpu.memory_space<vmem>>, %arg18: memref<1x64xf32, #tpu.memory_space<vmem>>, %arg19: memref<1x1xf32, #tpu.memory_space<vmem>>, %arg20: memref<32x32xf32, #tpu.memory_space<vmem>>, %arg21: memref<1x32xf32, #tpu.memory_space<vmem>>, %arg22: memref<8x128xf32, #tpu.memory_space<vmem>>, %arg23: memref<1x1xf32, #tpu.memory_space<vmem>>) attributes {dimension_semantics = [], scalar_prefetch = 0 : i64, scratch_operands = 0 : i64, tpu.core_type = #tpu.core_type<tc>} {
    %c0 = arith.constant 0 : index
    %c0_0 = arith.constant 0 : index
    %0 = vector.load %arg0[%c0, %c0_0] : memref<64x32xf32, #tpu.memory_space<vmem>>, vector<64x32xf32>
    %c0_1 = arith.constant 0 : index
    %c0_2 = arith.constant 0 : index
    %1 = vector.load %arg1[%c0_1, %c0_2] : memref<8x8xi32, #tpu.memory_space<vmem>>, vector<8x8xi32>
    %c0_3 = arith.constant 0 : index
    %c0_4 = arith.constant 0 : index
    %2 = vector.load %arg2[%c0_3, %c0_4] : memref<8x8xf32, #tpu.memory_space<vmem>>, vector<8x8xf32>
    %3 = vector.shape_cast %1 : vector<8x8xi32> to vector<8x8x1xi32>
    %4 = tpu.iota {dimensions = array<i32: 2>} : vector<8x8x64xi32>
    %5 = vector.broadcast %3 : vector<8x8x1xi32> to vector<8x8x64xi32>
    %6 = arith.cmpi eq, %5, %4 : vector<8x8x64xi32>
    %7 = arith.extui %6 : vector<8x8x64xi1> to vector<8x8x64xi32>
    %8 = arith.sitofp %7 : vector<8x8x64xi32> to vector<8x8x64xf32>
    %9 = vector.shape_cast %2 : vector<8x8xf32> to vector<8x8x1xf32>
    %10 = vector.broadcast %9 : vector<8x8x1xf32> to vector<8x8x64xf32>
    %11 = arith.mulf %8, %10 : vector<8x8x64xf32>
    %cst = arith.constant dense<0.000000e+00> : vector<8x64xf32>
    %12 = vector.multi_reduction <add>, %11, %cst [1] : vector<8x8x64xf32> to vector<8x64xf32>
    %cst_5 = arith.constant dense<0.000000e+00> : vector<8xf32>
    %13 = vector.multi_reduction <add>, %2, %cst_5 [1] : vector<8x8xf32> to vector<8xf32>
    %14 = vector.shape_cast %13 : vector<8xf32> to vector<8x1xf32>
    %cst_6 = arith.constant 9.99999997E-7 : f32
    %15 = vector.broadcast %cst_6 : f32 to vector<8x1xf32>
    %16 = arith.maximumf %14, %15 : vector<8x1xf32>
    %17 = tpu.reciprocal %16 {approx = true} : vector<8x1xf32> -> vector<8x1xf32>
    %18 = arith.truncf %12 : vector<8x64xf32> to vector<8x64xbf16>
    %19 = arith.truncf %0 : vector<64x32xf32> to vector<64x32xbf16>
    %cst_7 = arith.constant dense<0.000000e+00> : vector<8x32xf32>
    %20 = tpu.matmul %18, %19, %cst_7 {dimension_numbers = #tpu.dot_dimension_numbers<[1], [0], [0], [1], [0, 0, 1, 1], [], []>} : vector<8x64xbf16>, vector<64x32xbf16>, vector<8x32xf32> -> vector<8x32xf32>
    %21 = vector.broadcast %17 : vector<8x1xf32> to vector<8x32xf32>
    %22 = arith.mulf %20, %21 : vector<8x32xf32>
    %c0_8 = arith.constant 0 : index
    %c0_9 = arith.constant 0 : index
    %23 = vector.load %arg3[%c0_8, %c0_9] : memref<8x8xi32, #tpu.memory_space<vmem>>, vector<8x8xi32>
    %c0_10 = arith.constant 0 : index
    %c0_11 = arith.constant 0 : index
    %24 = vector.load %arg4[%c0_10, %c0_11] : memref<8x8xf32, #tpu.memory_space<vmem>>, vector<8x8xf32>
    %25 = vector.shape_cast %23 : vector<8x8xi32> to vector<8x8x1xi32>
    %26 = tpu.iota {dimensions = array<i32: 2>} : vector<8x8x64xi32>
    %27 = vector.broadcast %25 : vector<8x8x1xi32> to vector<8x8x64xi32>
    %28 = arith.cmpi eq, %27, %26 : vector<8x8x64xi32>
    %29 = arith.extui %28 : vector<8x8x64xi1> to vector<8x8x64xi32>
    %30 = arith.sitofp %29 : vector<8x8x64xi32> to vector<8x8x64xf32>
    %31 = vector.shape_cast %24 : vector<8x8xf32> to vector<8x8x1xf32>
    %32 = vector.broadcast %31 : vector<8x8x1xf32> to vector<8x8x64xf32>
    %33 = arith.mulf %30, %32 : vector<8x8x64xf32>
    %cst_12 = arith.constant dense<0.000000e+00> : vector<8x64xf32>
    %34 = vector.multi_reduction <add>, %33, %cst_12 [1] : vector<8x8x64xf32> to vector<8x64xf32>
    %cst_13 = arith.constant dense<0.000000e+00> : vector<8xf32>
    %35 = vector.multi_reduction <add>, %24, %cst_13 [1] : vector<8x8xf32> to vector<8xf32>
    %36 = vector.shape_cast %35 : vector<8xf32> to vector<8x1xf32>
    %cst_14 = arith.constant 9.99999997E-7 : f32
    %37 = vector.broadcast %cst_14 : f32 to vector<8x1xf32>
    %38 = arith.maximumf %36, %37 : vector<8x1xf32>
    %39 = tpu.reciprocal %38 {approx = true} : vector<8x1xf32> -> vector<8x1xf32>
    %40 = arith.truncf %34 : vector<8x64xf32> to vector<8x64xbf16>
    %41 = arith.truncf %0 : vector<64x32xf32> to vector<64x32xbf16>
    %cst_15 = arith.constant dense<0.000000e+00> : vector<8x32xf32>
    %42 = tpu.matmul %40, %41, %cst_15 {dimension_numbers = #tpu.dot_dimension_numbers<[1], [0], [0], [1], [0, 0, 1, 1], [], []>} : vector<8x64xbf16>, vector<64x32xbf16>, vector<8x32xf32> -> vector<8x32xf32>
    %43 = vector.broadcast %39 : vector<8x1xf32> to vector<8x32xf32>
    %44 = arith.mulf %42, %43 : vector<8x32xf32>
    %c0_16 = arith.constant 0 : index
    %c0_17 = arith.constant 0 : index
    %45 = vector.load %arg9[%c0_16, %c0_17] : memref<32x32xf32, #tpu.memory_space<vmem>>, vector<32x32xf32>
    %46 = arith.truncf %22 : vector<8x32xf32> to vector<8x32xbf16>
    %47 = arith.truncf %45 : vector<32x32xf32> to vector<32x32xbf16>
    %cst_18 = arith.constant dense<0.000000e+00> : vector<8x32xf32>
    %48 = tpu.matmul %46, %47, %cst_18 {dimension_numbers = #tpu.dot_dimension_numbers<[1], [0], [0], [1], [0, 0, 1, 1], [], []>} : vector<8x32xbf16>, vector<32x32xbf16>, vector<8x32xf32> -> vector<8x32xf32>
    %c0_19 = arith.constant 0 : index
    %c0_20 = arith.constant 0 : index
    %49 = vector.load %arg10[%c0_19, %c0_20] : memref<32x32xf32, #tpu.memory_space<vmem>>, vector<32x32xf32>
    %50 = arith.truncf %44 : vector<8x32xf32> to vector<8x32xbf16>
    %51 = arith.truncf %49 : vector<32x32xf32> to vector<32x32xbf16>
    %cst_21 = arith.constant dense<0.000000e+00> : vector<8x32xf32>
    %52 = tpu.matmul %50, %51, %cst_21 {dimension_numbers = #tpu.dot_dimension_numbers<[1], [0], [0], [1], [0, 0, 1, 1], [], []>} : vector<8x32xbf16>, vector<32x32xbf16>, vector<8x32xf32> -> vector<8x32xf32>
    %53 = arith.addf %48, %52 : vector<8x32xf32>
    %c0_22 = arith.constant 0 : index
    %c0_23 = arith.constant 0 : index
    %54 = vector.load %arg11[%c0_22, %c0_23] : memref<1x32xf32, #tpu.memory_space<vmem>>, vector<1x32xf32>
    %55 = vector.broadcast %54 : vector<1x32xf32> to vector<8x32xf32>
    %56 = arith.addf %53, %55 : vector<8x32xf32>
    %57 = math.tanh %56 : vector<8x32xf32>
    %c0_24 = arith.constant 0 : index
    %c0_25 = arith.constant 0 : index
    %58 = vector.load %arg12[%c0_24, %c0_25] : memref<32x32xf32, #tpu.memory_space<vmem>>, vector<32x32xf32>
    %59 = arith.truncf %57 : vector<8x32xf32> to vector<8x32xbf16>
    %60 = arith.truncf %58 : vector<32x32xf32> to vector<32x32xbf16>
    %cst_26 = arith.constant dense<0.000000e+00> : vector<8x32xf32>
    %61 = tpu.matmul %59, %60, %cst_26 {dimension_numbers = #tpu.dot_dimension_numbers<[1], [0], [0], [1], [0, 0, 1, 1], [], []>} : vector<8x32xbf16>, vector<32x32xbf16>, vector<8x32xf32> -> vector<8x32xf32>
    %c0_27 = arith.constant 0 : index
    %c0_28 = arith.constant 0 : index
    %62 = vector.load %arg13[%c0_27, %c0_28] : memref<1x32xf32, #tpu.memory_space<vmem>>, vector<1x32xf32>
    %63 = vector.broadcast %62 : vector<1x32xf32> to vector<8x32xf32>
    %64 = arith.addf %61, %63 : vector<8x32xf32>
    %c0_29 = arith.constant 0 : index
    %c0_30 = arith.constant 0 : index
    %65 = vector.load %arg5[%c0_29, %c0_30] : memref<1x8xi32, #tpu.memory_space<vmem>>, vector<1x8xi32>
    %66 = tpu.iota {dimensions = array<i32: 0>} : vector<128x8xi32>
    %67 = vector.broadcast %65 : vector<1x8xi32> to vector<128x8xi32>
    %68 = arith.cmpi eq, %66, %67 : vector<128x8xi32>
    %69 = arith.extui %68 : vector<128x8xi1> to vector<128x8xi32>
    %70 = arith.sitofp %69 : vector<128x8xi32> to vector<128x8xf32>
    %cst_31 = arith.constant dense<0.000000e+00> : vector<128xf32>
    %71 = vector.multi_reduction <add>, %70, %cst_31 [1] : vector<128x8xf32> to vector<128xf32>
    %72 = vector.shape_cast %71 : vector<128xf32> to vector<128x1xf32>
    %cst_32 = arith.constant 1.000000e+00 : f32
    %73 = vector.broadcast %cst_32 : f32 to vector<128x1xf32>
    %74 = arith.maximumf %72, %73 : vector<128x1xf32>
    %75 = tpu.reciprocal %74 {approx = true} : vector<128x1xf32> -> vector<128x1xf32>
    %76 = vector.broadcast %75 : vector<128x1xf32> to vector<128x8xf32>
    %77 = arith.mulf %70, %76 : vector<128x8xf32>
    %78 = arith.truncf %77 : vector<128x8xf32> to vector<128x8xbf16>
    %79 = arith.truncf %64 : vector<8x32xf32> to vector<8x32xbf16>
    %cst_33 = arith.constant dense<0.000000e+00> : vector<128x32xf32>
    %80 = tpu.matmul %78, %79, %cst_33 {dimension_numbers = #tpu.dot_dimension_numbers<[1], [0], [0], [1], [0, 0, 1, 1], [], []>} : vector<128x8xbf16>, vector<8x32xbf16>, vector<128x32xf32> -> vector<128x32xf32>
    %c0_34 = arith.constant 0 : index
    %c0_35 = arith.constant 0 : index
    %81 = vector.load %arg14[%c0_34, %c0_35] : memref<32x64xf32, #tpu.memory_space<vmem>>, vector<32x64xf32>
    %82 = arith.truncf %80 : vector<128x32xf32> to vector<128x32xbf16>
    %83 = arith.truncf %81 : vector<32x64xf32> to vector<32x64xbf16>
    %cst_36 = arith.constant dense<0.000000e+00> : vector<128x64xf32>
    %84 = tpu.matmul %82, %83, %cst_36 {dimension_numbers = #tpu.dot_dimension_numbers<[1], [0], [0], [1], [0, 0, 1, 1], [], []>} : vector<128x32xbf16>, vector<32x64xbf16>, vector<128x64xf32> -> vector<128x64xf32>
    %c0_37 = arith.constant 0 : index
    %c0_38 = arith.constant 0 : index
    %85 = vector.load %arg15[%c0_37, %c0_38] : memref<1x64xf32, #tpu.memory_space<vmem>>, vector<1x64xf32>
    %86 = vector.broadcast %85 : vector<1x64xf32> to vector<128x64xf32>
    %87 = arith.addf %84, %86 : vector<128x64xf32>
    %cst_39 = arith.constant 0.000000e+00 : f32
    %88 = vector.broadcast %cst_39 : f32 to vector<128x64xf32>
    %89 = arith.maximumf %87, %88 : vector<128x64xf32>
    %c0_40 = arith.constant 0 : index
    %c0_41 = arith.constant 0 : index
    %90 = vector.load %arg16[%c0_40, %c0_41] : memref<64x32xf32, #tpu.memory_space<vmem>>, vector<64x32xf32>
    %91 = arith.truncf %89 : vector<128x64xf32> to vector<128x64xbf16>
    %92 = arith.truncf %90 : vector<64x32xf32> to vector<64x32xbf16>
    %cst_42 = arith.constant dense<0.000000e+00> : vector<128x32xf32>
    %93 = tpu.matmul %91, %92, %cst_42 {dimension_numbers = #tpu.dot_dimension_numbers<[1], [0], [0], [1], [0, 0, 1, 1], [], []>} : vector<128x64xbf16>, vector<64x32xbf16>, vector<128x32xf32> -> vector<128x32xf32>
    %c0_43 = arith.constant 0 : index
    %c0_44 = arith.constant 0 : index
    %94 = vector.load %arg17[%c0_43, %c0_44] : memref<1x32xf32, #tpu.memory_space<vmem>>, vector<1x32xf32>
    %95 = vector.broadcast %94 : vector<1x32xf32> to vector<128x32xf32>
    %96 = arith.addf %93, %95 : vector<128x32xf32>
    %c0_45 = arith.constant 0 : index
    %c0_46 = arith.constant 0 : index
    %97 = vector.load %arg18[%c0_45, %c0_46] : memref<1x64xf32, #tpu.memory_space<vmem>>, vector<1x64xf32>
    %98 = arith.truncf %97 : vector<1x64xf32> to vector<1x64xbf16>
    %99 = arith.truncf %89 : vector<128x64xf32> to vector<128x64xbf16>
    %cst_47 = arith.constant dense<0.000000e+00> : vector<1x128xf32>
    %100 = tpu.matmul %98, %99, %cst_47 {dimension_numbers = #tpu.dot_dimension_numbers<[1], [1], [0], [0], [0, 0, 1, 0], [], []>} : vector<1x64xbf16>, vector<128x64xbf16>, vector<1x128xf32> -> vector<1x128xf32>
    %c0_48 = arith.constant 0 : index
    %c0_49 = arith.constant 0 : index
    %101 = vector.load %arg19[%c0_48, %c0_49] : memref<1x1xf32, #tpu.memory_space<vmem>>, vector<1x1xf32>
    %102 = vector.broadcast %101 : vector<1x1xf32> to vector<1x128xf32>
    %103 = arith.addf %100, %102 : vector<1x128xf32>
    %c0_50 = arith.constant 0 : index
    %c0_51 = arith.constant 0 : index
    %104 = vector.load %arg6[%c0_50, %c0_51] : memref<8x8xi32, #tpu.memory_space<vmem>>, vector<8x8xi32>
    %c0_52 = arith.constant 0 : index
    %c0_53 = arith.constant 0 : index
    %105 = vector.load %arg7[%c0_52, %c0_53] : memref<8x8xf32, #tpu.memory_space<vmem>>, vector<8x8xf32>
    %106 = vector.shape_cast %104 : vector<8x8xi32> to vector<8x8x1xi32>
    %107 = tpu.iota {dimensions = array<i32: 2>} : vector<8x8x64xi32>
    %108 = vector.broadcast %106 : vector<8x8x1xi32> to vector<8x8x64xi32>
    %109 = arith.cmpi eq, %108, %107 : vector<8x8x64xi32>
    %110 = arith.extui %109 : vector<8x8x64xi1> to vector<8x8x64xi32>
    %111 = arith.sitofp %110 : vector<8x8x64xi32> to vector<8x8x64xf32>
    %112 = vector.shape_cast %105 : vector<8x8xf32> to vector<8x8x1xf32>
    %113 = vector.broadcast %112 : vector<8x8x1xf32> to vector<8x8x64xf32>
    %114 = arith.mulf %111, %113 : vector<8x8x64xf32>
    %cst_54 = arith.constant dense<0.000000e+00> : vector<8x64xf32>
    %115 = vector.multi_reduction <add>, %114, %cst_54 [1] : vector<8x8x64xf32> to vector<8x64xf32>
    %cst_55 = arith.constant dense<0.000000e+00> : vector<8xf32>
    %116 = vector.multi_reduction <add>, %105, %cst_55 [1] : vector<8x8xf32> to vector<8xf32>
    %117 = vector.shape_cast %116 : vector<8xf32> to vector<8x1xf32>
    %cst_56 = arith.constant 9.99999997E-7 : f32
    %118 = vector.broadcast %cst_56 : f32 to vector<8x1xf32>
    %119 = arith.maximumf %117, %118 : vector<8x1xf32>
    %120 = tpu.reciprocal %119 {approx = true} : vector<8x1xf32> -> vector<8x1xf32>
    %121 = arith.truncf %115 : vector<8x64xf32> to vector<8x64xbf16>
    %122 = arith.truncf %0 : vector<64x32xf32> to vector<64x32xbf16>
    %cst_57 = arith.constant dense<0.000000e+00> : vector<8x32xf32>
    %123 = tpu.matmul %121, %122, %cst_57 {dimension_numbers = #tpu.dot_dimension_numbers<[1], [0], [0], [1], [0, 0, 1, 1], [], []>} : vector<8x64xbf16>, vector<64x32xbf16>, vector<8x32xf32> -> vector<8x32xf32>
    %124 = vector.broadcast %120 : vector<8x1xf32> to vector<8x32xf32>
    %125 = arith.mulf %123, %124 : vector<8x32xf32>
    %c0_58 = arith.constant 0 : index
    %c0_59 = arith.constant 0 : index
    %126 = vector.load %arg20[%c0_58, %c0_59] : memref<32x32xf32, #tpu.memory_space<vmem>>, vector<32x32xf32>
    %127 = arith.truncf %125 : vector<8x32xf32> to vector<8x32xbf16>
    %128 = arith.truncf %126 : vector<32x32xf32> to vector<32x32xbf16>
    %cst_60 = arith.constant dense<0.000000e+00> : vector<8x32xf32>
    %129 = tpu.matmul %127, %128, %cst_60 {dimension_numbers = #tpu.dot_dimension_numbers<[1], [0], [0], [1], [0, 0, 1, 1], [], []>} : vector<8x32xbf16>, vector<32x32xbf16>, vector<8x32xf32> -> vector<8x32xf32>
    %c0_61 = arith.constant 0 : index
    %c0_62 = arith.constant 0 : index
    %130 = vector.load %arg21[%c0_61, %c0_62] : memref<1x32xf32, #tpu.memory_space<vmem>>, vector<1x32xf32>
    %131 = vector.broadcast %130 : vector<1x32xf32> to vector<8x32xf32>
    %132 = arith.addf %129, %131 : vector<8x32xf32>
    %133 = math.tanh %132 : vector<8x32xf32>
    %134 = tpu.iota {dimensions = array<i32: 1>} : vector<1x128xi32>
    %c2_i32 = arith.constant 2 : i32
    %135 = vector.broadcast %c2_i32 : i32 to vector<1x128xi32>
    %136 = arith.cmpi slt, %134, %135 : vector<1x128xi32>
    %cst_63 = arith.constant 0.000000e+00 : f32
    %cst_64 = arith.constant -1.000000e+30 : f32
    %137 = vector.broadcast %cst_63 : f32 to vector<1x128xf32>
    %138 = vector.broadcast %cst_64 : f32 to vector<1x128xf32>
    %139 = arith.select %136, %137, %138 : vector<1x128xi1>, vector<1x128xf32>
    %140 = arith.truncf %133 : vector<8x32xf32> to vector<8x32xbf16>
    %141 = arith.truncf %96 : vector<128x32xf32> to vector<128x32xbf16>
    %cst_65 = arith.constant dense<0.000000e+00> : vector<8x128xf32>
    %142 = tpu.matmul %140, %141, %cst_65 {dimension_numbers = #tpu.dot_dimension_numbers<[1], [1], [0], [0], [0, 0, 1, 0], [], []>} : vector<8x32xbf16>, vector<128x32xbf16>, vector<8x128xf32> -> vector<8x128xf32>
    %143 = vector.broadcast %103 : vector<1x128xf32> to vector<8x128xf32>
    %144 = arith.addf %142, %143 : vector<8x128xf32>
    %145 = vector.broadcast %139 : vector<1x128xf32> to vector<8x128xf32>
    %146 = arith.addf %144, %145 : vector<8x128xf32>
    %c0_66 = arith.constant 0 : index
    %c0_67 = arith.constant 0 : index
    %147 = vector.load %arg22[%c0_66, %c0_67] : memref<8x128xf32, #tpu.memory_space<vmem>>, vector<8x128xf32>
    tpu.vector_store %arg22[%c0_66, %c0_67], %146 {strides = array<i32>} : memref<8x128xf32, #tpu.memory_space<vmem>>, vector<8x128xf32>,
    %c0_68 = arith.constant 0 : index
    %c0_69 = arith.constant 0 : index
    %148 = vector.load %arg8[%c0_68, %c0_69] : memref<8x1xi32, #tpu.memory_space<vmem>>, vector<8x1xi32>
    %149 = tpu.iota {dimensions = array<i32: 1>} : vector<8x128xi32>
    %150 = vector.broadcast %148 : vector<8x1xi32> to vector<8x128xi32>
    %151 = arith.cmpi eq, %149, %150 : vector<8x128xi32>
    %152 = arith.extui %151 : vector<8x128xi1> to vector<8x128xi32>
    %153 = arith.sitofp %152 : vector<8x128xi32> to vector<8x128xf32>
    %cst_70 = arith.constant dense<0xFF800000> : vector<8xf32>
    %154 = vector.multi_reduction <maximumf>, %146, %cst_70 [1] : vector<8x128xf32> to vector<8xf32>
    %155 = vector.shape_cast %154 : vector<8xf32> to vector<8x1xf32>
    %156 = vector.broadcast %155 : vector<8x1xf32> to vector<8x128xf32>
    %157 = arith.subf %146, %156 : vector<8x128xf32>
    %158 = math.exp %157 : vector<8x128xf32>
    %cst_71 = arith.constant dense<0.000000e+00> : vector<8xf32>
    %159 = vector.multi_reduction <add>, %158, %cst_71 [1] : vector<8x128xf32> to vector<8xf32>
    %160 = vector.shape_cast %159 : vector<8xf32> to vector<8x1xf32>
    %161 = math.log %160 : vector<8x1xf32>
    %162 = vector.broadcast %161 : vector<8x1xf32> to vector<8x128xf32>
    %163 = arith.subf %157, %162 : vector<8x128xf32>
    %164 = arith.mulf %153, %163 : vector<8x128xf32>
    %cst_72 = arith.constant dense<0.000000e+00> : vector<8xf32>
    %165 = vector.multi_reduction <add>, %164, %cst_72 [1] : vector<8x128xf32> to vector<8xf32>
    %166 = vector.shape_cast %165 : vector<8xf32> to vector<8x1xf32>
    %cst_73 = arith.constant 0.000000e+00 : f32
    %167 = vector.broadcast %cst_73 : f32 to vector<8x1xf32>
    %168 = arith.subf %167, %166 : vector<8x1xf32>
    %169 = vector.shape_cast %168 : vector<8x1xf32> to vector<1x8x1xf32>
    %cst_74 = arith.constant dense<0.000000e+00> : vector<1xf32>
    %170 = vector.multi_reduction <add>, %169, %cst_74 [1, 2] : vector<1x8x1xf32> to vector<1xf32>
    %171 = vector.shape_cast %170 : vector<1xf32> to vector<1x1x1xf32>
    %172 = vector.extract %171[0, 0, 0] : f32 from vector<1x1x1xf32>
    %173 = vector.broadcast %172 : f32 to vector<1x1xf32>
    %cst_75 = arith.constant 8.000000e+00 : f32
    %174 = vector.broadcast %cst_75 : f32 to vector<1x1xf32>
    %175 = arith.divf %173, %174 : vector<1x1xf32>
    %c0_76 = arith.constant 0 : index
    %c0_77 = arith.constant 0 : index
    %176 = vector.load %arg23[%c0_76, %c0_77] : memref<1x1xf32, #tpu.memory_space<vmem>>, vector<1x1xf32>
    tpu.vector_store %arg23[%c0_76, %c0_77], %175 {strides = array<i32>} : memref<1x1xf32, #tpu.memory_space<vmem>>, vector<1x1xf32>,
    return
  }
}

</mosaic_0001>

<llo_original>
// kernel: leopard_forward.1
$region0: #{leopard_forward.1}
  #allocation0 [shape = 'u32[]', space=smem, size = 0x4, offset = 0x4, fixed_abs, tag = 'smem constant byte address 0x4 - core index']
  #allocation1 [shape = 'u32[144,128]{1,0:T(1,128)}', space=vmem, size = 0x12000, scoped, tag = 'internal scratch']
  #allocation2 [shape = 'f32[1,1]{1,0:T(1,128)S(1)}', space=vmem, size = 0x200, scoped, tag = 'scoped memory for leopard_forward.1']
  %s0 = inlined_call_operand.vmem [shape: f32[64,32], index: 0, kind: input, shape index: {}]
  %s1 = inlined_call_operand.vmem [shape: s32[8,8], index: 1, kind: input, shape index: {}]
  %s2 = inlined_call_operand.vmem [shape: f32[8,8], index: 2, kind: input, shape index: {}]
  %s3 = inlined_call_operand.vmem [shape: s32[8,8], index: 3, kind: input, shape index: {}]
  %s4 = inlined_call_operand.vmem [shape: f32[8,8], index: 4, kind: input, shape index: {}]
  %s5 = inlined_call_operand.vmem [shape: s32[1,8], index: 5, kind: input, shape index: {}]
  %s6 = inlined_call_operand.vmem [shape: s32[8,8], index: 6, kind: input, shape index: {}]
  %s7 = inlined_call_operand.vmem [shape: f32[8,8], index: 7, kind: input, shape index: {}]
  %s8 = inlined_call_operand.vmem [shape: s32[8,1], index: 8, kind: input, shape index: {}]
  %s9 = inlined_call_operand.vmem [shape: f32[32,32], index: 9, kind: input, shape index: {}]
  %s10 = inlined_call_operand.vmem [shape: f32[32,32], index: 10, kind: input, shape index: {}]
  %s11 = inlined_call_operand.vmem [shape: f32[1,32], index: 11, kind: input, shape index: {}]
  %s12 = inlined_call_operand.vmem [shape: f32[32,32], index: 12, kind: input, shape index: {}]
  %s13 = inlined_call_operand.vmem [shape: f32[1,32], index: 13, kind: input, shape index: {}]
  %s14 = inlined_call_operand.vmem [shape: f32[32,64], index: 14, kind: input, shape index: {}]
  %s15 = inlined_call_operand.vmem [shape: f32[1,64], index: 15, kind: input, shape index: {}]
  %s16 = inlined_call_operand.vmem [shape: f32[64,32], index: 16, kind: input, shape index: {}]
  %s17 = inlined_call_operand.vmem [shape: f32[1,32], index: 17, kind: input, shape index: {}]
  %s18 = inlined_call_operand.vmem [shape: f32[1,64], index: 18, kind: input, shape index: {}]
  %s19 = inlined_call_operand.<no memory space> [shape: f32[1,1], index: 19, kind: input, shape index: {}]
  %s20 = inlined_call_operand.vmem [shape: f32[32,32], index: 20, kind: input, shape index: {}]
  %s21 = inlined_call_operand.vmem [shape: f32[1,32], index: 21, kind: input, shape index: {}]
  %s22 = inlined_call_operand.vmem [shape: f32[8,128], index: 22, kind: output, shape index: {0}]
  %s23 = inlined_call_operand.hbm [shape: f32[1,1], index: 23, kind: output, shape index: {1}]
  %24 = xla_tuple %s22, %s23
  %s25 = sld [smem:[#allocation0]]
  $region106: #{leopard_forward.1} parent=0
    _
  %s27 = ssub.s32 1, %s25
  %s28 = scalar_select 0, %s27, %s25
  %v29 = vstv %s19
  %30 = vst [vmem:[#allocation2] sm:$0x1] %v29
  $region1: #{leopard_forward.1} parent=0
    #allocation3 [shape = 'u8[512]{0}', space=vmem, size = 0x400, scoped, tag = 'output window, operand 1, single buffered']
    #allocation4 [shape = 's32[1]{0}', space=sflag, size = 0x4, scoped, tag = 'scoped memory for leopard_forward.1']
    %31 = vsyncpa [#allocation4], 0
    // Predicated region
    $region2: #{leopard_forward.1} parent=1 // pred_check
      _
    $region3: #{leopard_forward.1} parent=1 // pred_check_branch
      %33 = sbr.rel (0) target = $region5
    $region4: #{leopard_forward.1} parent=1 // pred_region
      _
    $region5: #{leopard_forward.1} parent=1 // pred_fallthru
      _
    // Predicated region
    $region6: #{leopard_forward.1} parent=1 // pred_check
      _
    $region7: #{leopard_forward.1} parent=1 // pred_check_branch
      %35 = sbr.rel (0) target = $region9
    $region8: #{leopard_forward.1} parent=1 // pred_region
      _
    $region9: #{leopard_forward.1} parent=1 // pred_fallthru
      _
    // Predicated region
    $region10: #{leopard_forward.1} parent=1 // pred_check
      _
    $region11: #{leopard_forward.1} parent=1 // pred_check_branch
      %37 = sbr.rel (0) target = $region13
    $region12: #{leopard_forward.1} parent=1 // pred_region
      _
    $region13: #{leopard_forward.1} parent=1 // pred_fallthru
      _
    // Predicated region
    $region14: #{leopard_forward.1} parent=1 // pred_check
      _
    $region15: #{leopard_forward.1} parent=1 // pred_check_branch
      %39 = sbr.rel (0) target = $region17
    $region16: #{leopard_forward.1} parent=1 // pred_region
      _
    $region17: #{leopard_forward.1} parent=1 // pred_fallthru
      _
    // Predicated region
    $region18: #{leopard_forward.1} parent=1 // pred_check
      _
    $region19: #{leopard_forward.1} parent=1 // pred_check_branch
      %41 = sbr.rel (0) target = $region21
    $region20: #{leopard_forward.1} parent=1 // pred_region
      _
    $region21: #{leopard_forward.1} parent=1 // pred_fallthru
      _
    // Predicated region
    $region22: #{leopard_forward.1} parent=1 // pred_check
      _
    $region23: #{leopard_forward.1} parent=1 // pred_check_branch
      %43 = sbr.rel (0) target = $region25
    $region24: #{leopard_forward.1} parent=1 // pred_region
      _
    $region25: #{leopard_forward.1} parent=1 // pred_fallthru
      _
    // Predicated region
    $region26: #{leopard_forward.1} parent=1 // pred_check
      _
    $region27: #{leopard_forward.1} parent=1 // pred_check_branch
      %45 = sbr.rel (0) target = $region29
    $region28: #{leopard_forward.1} parent=1 // pred_region
      _
    $region29: #{leopard_forward.1} parent=1 // pred_fallthru
      _
    // Predicated region
    $region30: #{leopard_forward.1} parent=1 // pred_check
      _
    $region31: #{leopard_forward.1} parent=1 // pred_check_branch
      %47 = sbr.rel (0) target = $region33
    $region32: #{leopard_forward.1} parent=1 // pred_region
      _
    $region33: #{leopard_forward.1} parent=1 // pred_fallthru
      _
    // Predicated region
    $region34: #{leopard_forward.1} parent=1 // pred_check
      _
    $region35: #{leopard_forward.1} parent=1 // pred_check_branch
      %49 = sbr.rel (0) target = $region37
    $region36: #{leopard_forward.1} parent=1 // pred_region
      _
    $region37: #{leopard_forward.1} parent=1 // pred_fallthru
      _
    // Predicated region
    $region38: #{leopard_forward.1} parent=1 // pred_check
      _
    $region39: #{leopard_forward.1} parent=1 // pred_check_branch
      %51 = sbr.rel (0) target = $region41
    $region40: #{leopard_forward.1} parent=1 // pred_region
      _
    $region41: #{leopard_forward.1} parent=1 // pred_fallthru
      _
    // Predicated region
    $region42: #{leopard_forward.1} parent=1 // pred_check
      _
    $region43: #{leopard_forward.1} parent=1 // pred_check_branch
      %53 = sbr.rel (0) target = $region45
    $region44: #{leopard_forward.1} parent=1 // pred_region
      _
    $region45: #{leopard_forward.1} parent=1 // pred_fallthru
      _
    // Predicated region
    $region46: #{leopard_forward.1} parent=1 // pred_check
      _
    $region47: #{leopard_forward.1} parent=1 // pred_check_branch
      %55 = sbr.rel (0) target = $region49
    $region48: #{leopard_forward.1} parent=1 // pred_region
      _
    $region49: #{leopard_forward.1} parent=1 // pred_fallthru
      _
    // Predicated region
    $region50: #{leopard_forward.1} parent=1 // pred_check
      _
    $region51: #{leopard_forward.1} parent=1 // pred_check_branch
      %57 = sbr.rel (0) target = $region53
    $region52: #{leopard_forward.1} parent=1 // pred_region
      _
    $region53: #{leopard_forward.1} parent=1 // pred_fallthru
      _
    // Predicated region
    $region54: #{leopard_forward.1} parent=1 // pred_check
      _
    $region55: #{leopard_forward.1} parent=1 // pred_check_branch
      %59 = sbr.rel (0) target = $region57
    $region56: #{leopard_forward.1} parent=1 // pred_region
      _
    $region57: #{leopard_forward.1} parent=1 // pred_fallthru
      _
    // Predicated region
    $region58: #{leopard_forward.1} parent=1 // pred_check
      _
    $region59: #{leopard_forward.1} parent=1 // pred_check_branch
      %61 = sbr.rel (0) target = $region61
    $region60: #{leopard_forward.1} parent=1 // pred_region
      _
    $region61: #{leopard_forward.1} parent=1 // pred_fallthru
      _
    // Predicated region
    $region62: #{leopard_forward.1} parent=1 // pred_check
      _
    $region63: #{leopard_forward.1} parent=1 // pred_check_branch
      %63 = sbr.rel (0) target = $region65
    $region64: #{leopard_forward.1} parent=1 // pred_region
      _
    $region65: #{leopard_forward.1} parent=1 // pred_fallthru
      _
    // Predicated region
    $region66: #{leopard_forward.1} parent=1 // pred_check
      _
    $region67: #{leopard_forward.1} parent=1 // pred_check_branch
      %65 = sbr.rel (0) target = $region69
    $region68: #{leopard_forward.1} parent=1 // pred_region
      _
    $region69: #{leopard_forward.1} parent=1 // pred_fallthru
      _
    // Predicated region
    $region70: #{leopard_forward.1} parent=1 // pred_check
      _
    $region71: #{leopard_forward.1} parent=1 // pred_check_branch
      %67 = sbr.rel (0) target = $region73
    $region72: #{leopard_forward.1} parent=1 // pred_region
      _
    $region73: #{leopard_forward.1} parent=1 // pred_fallthru
      _
    // Predicated region
    $region74: #{leopard_forward.1} parent=1 // pred_check
      _
    $region75: #{leopard_forward.1} parent=1 // pred_check_branch
      %69 = sbr.rel (0) target = $region77
    $region76: #{leopard_forward.1} parent=1 // pred_region
      _
    $region77: #{leopard_forward.1} parent=1 // pred_fallthru
      _
    // Predicated region
    $region78: #{leopard_forward.1} parent=1 // pred_check
      _
    $region79: #{leopard_forward.1} parent=1 // pred_check_branch
      %71 = sbr.rel (0) target = $region81
    $region80: #{leopard_forward.1} parent=1 // pred_region
      _
    $region81: #{leopard_forward.1} parent=1 // pred_fallthru
      _
    // Predicated region
    $region82: #{leopard_forward.1} parent=1 // pred_check
      _
    $region83: #{leopard_forward.1} parent=1 // pred_check_branch
      %73 = sbr.rel (0) target = $region85
    $region84: #{leopard_forward.1} parent=1 // pred_region
      _
    $region85: #{leopard_forward.1} parent=1 // pred_fallthru
      _
    // Predicated region
    $region86: #{leopard_forward.1} parent=1 // pred_check
      _
    $region87: #{leopard_forward.1} parent=1 // pred_check_branch
      %75 = sbr.rel (0) target = $region89
    $region88: #{leopard_forward.1} parent=1 // pred_region
      _
    $region89: #{leopard_forward.1} parent=1 // pred_fallthru
      _
    %v77 = vld [vmem:[%s0] sm:$0xff]
    %v78 = vld [vmem:[%s0 + $0x8] sm:$0xff]
    %v79 = vld [vmem:[%s0 + $0x10] sm:$0xff]
    %v80 = vld [vmem:[%s0 + $0x18] sm:$0xff]
    %v81 = vld [vmem:[%s0 + $0x20] sm:$0xff]
    %v82 = vld [vmem:[%s0 + $0x28] sm:$0xff]
    %v83 = vld [vmem:[%s0 + $0x30] sm:$0xff]
    %v84 = vld [vmem:[%s0 + $0x38] sm:$0xff]
    %v85 = vld [vmem:[%s1] sm:$0xff]
    %v86 = vld [vmem:[%s2] sm:$0xff]
    %v87 = vlaneseq
    %v88 = vshrl.u32 %v87, 7
    %v89 = vsub.s32 0, %v88
    %v90 = vrot.slane %v85, %v89
    %92 = vbcast.lane.b32.xlu0 %v90, 256
    %v93 = vpop.permute.xlu0 %92
    %v94 = vlaneseq
    %v95 = vshrl.u32 %v94, 7
    %v96 = vsub.s32 1, %v95
    %v97 = vrot.slane %v85, %v96
    %99 = vbcast.lane.b32.xlu0 %v97, 256
    %v100 = vpop.permute.xlu0 %99
    %v101 = vlaneseq
    %v102 = vshrl.u32 %v101, 7
    %v103 = vsub.s32 2, %v102
    %v104 = vrot.slane %v85, %v103
    %106 = vbcast.lane.b32.xlu0 %v104, 256
    %v107 = vpop.permute.xlu0 %106
    %v108 = vlaneseq
    %v109 = vshrl.u32 %v108, 7
    %v110 = vsub.s32 3, %v109
    %v111 = vrot.slane %v85, %v110
    %113 = vbcast.lane.b32.xlu0 %v111, 256
    %v114 = vpop.permute.xlu0 %113
    %v115 = vlaneseq
    %v116 = vshrl.u32 %v115, 7
    %v117 = vsub.s32 4, %v116
    %v118 = vrot.slane %v85, %v117
    %120 = vbcast.lane.b32.xlu0 %v118, 256
    %v121 = vpop.permute.xlu0 %120
    %v122 = vlaneseq
    %v123 = vshrl.u32 %v122, 7
    %v124 = vsub.s32 5, %v123
    %v125 = vrot.slane %v85, %v124
    %127 = vbcast.lane.b32.xlu0 %v125, 256
    %v128 = vpop.permute.xlu0 %127
    %v129 = vlaneseq
    %v130 = vshrl.u32 %v129, 7
    %v131 = vsub.s32 6, %v130
    %v132 = vrot.slane %v85, %v131
    %134 = vbcast.lane.b32.xlu0 %v132, 256
    %v135 = vpop.permute.xlu0 %134
    %v136 = vlaneseq
    %v137 = vshrl.u32 %v136, 7
    %v138 = vsub.s32 7, %v137
    %v139 = vrot.slane %v85, %v138
    %141 = vbcast.lane.b32.xlu0 %v139, 256
    %v142 = vpop.permute.xlu0 %141
    %v143 = vlaneseq
    %v144 = vand.u32 %v143, 127
    %vm145 = vcmp.eq.s32.totalorder %v93, %v144
    %vm146 = vcmp.eq.s32.totalorder %v100, %v144
    %vm147 = vcmp.eq.s32.totalorder %v107, %v144
    %vm148 = vcmp.eq.s32.totalorder %v114, %v144
    %vm149 = vcmp.eq.s32.totalorder %v121, %v144
    %vm150 = vcmp.eq.s32.totalorder %v128, %v144
    %vm151 = vcmp.eq.s32.totalorder %v135, %v144
    %vm152 = vcmp.eq.s32.totalorder %v142, %v144
    %v153 = vsel %vm145, 1, 0
    %v154 = vsel %vm146, 1, 0
    %v155 = vsel %vm147, 1, 0
    %v156 = vsel %vm148, 1, 0
    %v157 = vsel %vm149, 1, 0
    %v158 = vsel %vm150, 1, 0
    %v159 = vsel %vm151, 1, 0
    %v160 = vsel %vm152, 1, 0
    %v161 = vcvt.s32.f32 %v153
    %v162 = vcvt.s32.f32 %v154
    %v163 = vcvt.s32.f32 %v155
    %v164 = vcvt.s32.f32 %v156
    %v165 = vcvt.s32.f32 %v157
    %v166 = vcvt.s32.f32 %v158
    %v167 = vcvt.s32.f32 %v159
    %v168 = vcvt.s32.f32 %v160
    %v169 = vlaneseq
    %v170 = vshrl.u32 %v169, 7
    %v171 = vsub.s32 0, %v170
    %v172 = vrot.slane %v86, %v171
    %174 = vbcast.lane.b32.xlu0 %v172, 256
    %v175 = vpop.permute.xlu0 %174
    %v176 = vlaneseq
    %v177 = vshrl.u32 %v176, 7
    %v178 = vsub.s32 1, %v177
    %v179 = vrot.slane %v86, %v178
    %181 = vbcast.lane.b32.xlu0 %v179, 256
    %v182 = vpop.permute.xlu0 %181
    %v183 = vlaneseq
    %v184 = vshrl.u32 %v183, 7
    %v185 = vsub.s32 2, %v184
    %v186 = vrot.slane %v86, %v185
    %188 = vbcast.lane.b32.xlu0 %v186, 256
    %v189 = vpop.permute.xlu0 %188
    %v190 = vlaneseq
    %v191 = vshrl.u32 %v190, 7
    %v192 = vsub.s32 3, %v191
    %v193 = vrot.slane %v86, %v192
    %195 = vbcast.lane.b32.xlu0 %v193, 256
    %v196 = vpop.permute.xlu0 %195
    %v197 = vlaneseq
    %v198 = vshrl.u32 %v197, 7
    %v199 = vsub.s32 4, %v198
    %v200 = vrot.slane %v86, %v199
    %202 = vbcast.lane.b32.xlu0 %v200, 256
    %v203 = vpop.permute.xlu0 %202
    %v204 = vlaneseq
    %v205 = vshrl.u32 %v204, 7
    %v206 = vsub.s32 5, %v205
    %v207 = vrot.slane %v86, %v206
    %209 = vbcast.lane.b32.xlu0 %v207, 256
    %v210 = vpop.permute.xlu0 %209
    %v211 = vlaneseq
    %v212 = vshrl.u32 %v211, 7
    %v213 = vsub.s32 6, %v212
    %v214 = vrot.slane %v86, %v213
    %216 = vbcast.lane.b32.xlu0 %v214, 256
    %v217 = vpop.permute.xlu0 %216
    %v218 = vlaneseq
    %v219 = vshrl.u32 %v218, 7
    %v220 = vsub.s32 7, %v219
    %v221 = vrot.slane %v86, %v220
    %223 = vbcast.lane.b32.xlu0 %v221, 256
    %v224 = vpop.permute.xlu0 %223
    %v225 = vmul.f32 %v161, %v175
    %v226 = vmul.f32 %v162, %v182
    %v227 = vmul.f32 %v163, %v189
    %v228 = vmul.f32 %v164, %v196
    %v229 = vmul.f32 %v165, %v203
    %v230 = vmul.f32 %v166, %v210
    %v231 = vmul.f32 %v167, %v217
    %v232 = vmul.f32 %v168, %v224
    %vm233 = vcmask 523264
    %v234 = vsel %vm233, %v225, 0.0
    %v235 = vrot.slane %v234, 4
    %v236 = vadd.f32 %v234, %v235
    %v237 = vrot.slane %v236, 2
    %v238 = vadd.f32 %v236, %v237
    %v239 = vrot.slane %v238, 1
    %v240 = vadd.f32 %v238, %v239
    %v241 = vsel %vm233, %v226, 0.0
    %v242 = vrot.slane %v241, 4
    %v243 = vadd.f32 %v241, %v242
    %v244 = vrot.slane %v243, 2
    %v245 = vadd.f32 %v243, %v244
    %v246 = vrot.slane %v245, 1
    %v247 = vadd.f32 %v245, %v246
    %v248 = vsel %vm233, %v227, 0.0
    %v249 = vrot.slane %v248, 4
    %v250 = vadd.f32 %v248, %v249
    %v251 = vrot.slane %v250, 2
    %v252 = vadd.f32 %v250, %v251
    %v253 = vrot.slane %v252, 1
    %v254 = vadd.f32 %v252, %v253
    %v255 = vsel %vm233, %v228, 0.0
    %v256 = vrot.slane %v255, 4
    %v257 = vadd.f32 %v255, %v256
    %v258 = vrot.slane %v257, 2
    %v259 = vadd.f32 %v257, %v258
    %v260 = vrot.slane %v259, 1
    %v261 = vadd.f32 %v259, %v260
    %v262 = vsel %vm233, %v229, 0.0
    %v263 = vrot.slane %v262, 4
    %v264 = vadd.f32 %v262, %v263
    %v265 = vrot.slane %v264, 2
    %v266 = vadd.f32 %v264, %v265
    %v267 = vrot.slane %v266, 1
    %v268 = vadd.f32 %v266, %v267
    %v269 = vsel %vm233, %v230, 0.0
    %v270 = vrot.slane %v269, 4
    %v271 = vadd.f32 %v269, %v270
    %v272 = vrot.slane %v271, 2
    %v273 = vadd.f32 %v271, %v272
    %v274 = vrot.slane %v273, 1
    %v275 = vadd.f32 %v273, %v274
    %v276 = vsel %vm233, %v231, 0.0
    %v277 = vrot.slane %v276, 4
    %v278 = vadd.f32 %v276, %v277
    %v279 = vrot.slane %v278, 2
    %v280 = vadd.f32 %v278, %v279
    %v281 = vrot.slane %v280, 1
    %v282 = vadd.f32 %v280, %v281
    %v283 = vsel %vm233, %v232, 0.0
    %v284 = vrot.slane %v283, 4
    %v285 = vadd.f32 %v283, %v284
    %v286 = vrot.slane %v285, 2
    %v287 = vadd.f32 %v285, %v286
    %v288 = vrot.slane %v287, 1
    %v289 = vadd.f32 %v287, %v288
    %vm290 = vcmask 64512
    %v291 = vsel %vm290, %v86, 0.0
    %292 = vadd.xlane.f32.xlu0 %v291
    %v293 = vpop.xlane.xlu0 %292
    %v294 = vmax.f32 %v293, 1e-06
    %v295 = vrcp.pop %v294
    %v296 = vpack.c.bf16 %v240, %v240
    %v297 = vpack.c.bf16 %v247, %v247
    %v298 = vpack.c.bf16 %v254, %v254
    %v299 = vpack.c.bf16 %v261, %v261
    %v300 = vpack.c.bf16 %v268, %v268
    %v301 = vpack.c.bf16 %v275, %v275
    %v302 = vpack.c.bf16 %v282, %v282
    %v303 = vpack.c.bf16 %v289, %v289
    %v304 = vpack.c.bf16 %v78, %v77
    %v305 = vpack.c.bf16 %v80, %v79
    %v306 = vpack.c.bf16 %v82, %v81
    %v307 = vpack.c.bf16 %v84, %v83
    %v316 = vunpack.c.l.b16 %v296
    %v317 = vunpack.c.l.b16 %v297
    %v318 = vunpack.c.l.b16 %v298
    %v319 = vunpack.c.l.b16 %v299
    %v320 = vunpack.c.l.b16 %v300
    %v321 = vunpack.c.l.b16 %v301
    %v322 = vunpack.c.l.b16 %v302
    %v323 = vunpack.c.l.b16 %v303
    %vm324 = vcmask 1041409
    %v325 = vsel %vm324, %v317, %v316
    %vm326 = vcmask 1042434
    %v327 = vsel %vm326, %v318, %v325
    %vm328 = vcmask 1043459
    %v329 = vsel %vm328, %v319, %v327
    %vm330 = vcmask 1044484
    %v331 = vsel %vm330, %v320, %v329
    %vm332 = vcmask 1045509
    %v333 = vsel %vm332, %v321, %v331
    %vm334 = vcmask 1046534
    %v335 = vsel %vm334, %v322, %v333
    %vm336 = vcmask 1047559
    %v337 = vsel %vm336, %v323, %v335
    %v338 = vpack.c.b16 %v337, %v337
    %v340 = vsel %vm233, %v338, 0
    %342 = vmatprep.subr.bf16.mxu0 0
    %343 = vmatpush1.bf16.msra.mxu0 %v304
    %344 = vmatprep.subr.bf16.mxu0 0
    %345 = vmatpush1.bf16.msra.mxu0 %v305
    %346 = vmatprep.subr.bf16.mxu0 0
    %347 = vmatpush1.bf16.msra.mxu0 %v306
    %348 = vmatprep.subr.bf16.mxu0 0
    %349 = vmatpush1.bf16.msra.mxu0 %v307
    %350 = vmatprep.subr.bf16.mxu0 0
    %351 = vmatpush1.bf16.msra.mxu0 0
    %352 = vmatprep.subr.bf16.mxu0 0
    %353 = vmatpush1.bf16.msra.mxu0 0
    %354 = vmatprep.subr.bf16.mxu0 0
    %355 = vmatpush1.bf16.msra.mxu0 0
    %356 = vmatprep.subr.bf16.mxu0 0
    %357 = vmatpush1.bf16.msra.mxu0 0
    %358 = vmatprep.subr.bf16.mxu0 0
    %359 = vmatpush1.bf16.msra.mxu0 0
    %360 = vmatprep.subr.bf16.mxu0 0
    %361 = vmatpush1.bf16.msra.mxu0 0
    %362 = vmatprep.subr.bf16.mxu0 0
    %363 = vmatpush1.bf16.msra.mxu0 0
    %364 = vmatprep.subr.bf16.mxu0 0
    %365 = vmatpush1.bf16.msra.mxu0 0
    %366 = vmatprep.subr.bf16.mxu0 0
    %367 = vmatpush1.bf16.msra.mxu0 0
    %368 = vmatprep.subr.bf16.mxu0 0
    %369 = vmatpush1.bf16.msra.mxu0 0
    %370 = vmatprep.subr.bf16.mxu0 0
    %371 = vmatpush1.bf16.msra.mxu0 0
    %372 = vmatprep.subr.bf16.mxu0 0
    %373 = vmatpush1.bf16.msra.mxu0 0
    %374 = vmatprep.mubr.bf16.mxu0 0
    %375 = vmatmul.mubr.bf16.gmra.mrb[0].mxu0 %v340
    %v376 = vpop.f32.mrb[0].mxu0
    %v377 = vadd.f32 0.0, %v376
    %v378 = vpop.f32.mrb[0].mxu0
    %v379 = vpop.f32.mrb[0].mxu0
    %v380 = vpop.f32.mrb[0].mxu0
    %381 = vdwg.mxu0
    %v382 = vmul.f32 %v377, %v295
    %v383 = vld [vmem:[%s3] sm:$0xff]
    %v384 = vld [vmem:[%s4] sm:$0xff]
    %v385 = vlaneseq
    %v386 = vshrl.u32 %v385, 7
    %v387 = vsub.s32 0, %v386
    %v388 = vrot.slane %v383, %v387
    %390 = vbcast.lane.b32.xlu0 %v388, 256
    %v391 = vpop.permute.xlu0 %390
    %v392 = vlaneseq
    %v393 = vshrl.u32 %v392, 7
    %v394 = vsub.s32 1, %v393
    %v395 = vrot.slane %v383, %v394
    %397 = vbcast.lane.b32.xlu0 %v395, 256
    %v398 = vpop.permute.xlu0 %397
    %v399 = vlaneseq
    %v400 = vshrl.u32 %v399, 7
    %v401 = vsub.s32 2, %v400
    %v402 = vrot.slane %v383, %v401
    %404 = vbcast.lane.b32.xlu0 %v402, 256
    %v405 = vpop.permute.xlu0 %404
    %v406 = vlaneseq
    %v407 = vshrl.u32 %v406, 7
    %v408 = vsub.s32 3, %v407
    %v409 = vrot.slane %v383, %v408
    %411 = vbcast.lane.b32.xlu0 %v409, 256
    %v412 = vpop.permute.xlu0 %411
    %v413 = vlaneseq
    %v414 = vshrl.u32 %v413, 7
    %v415 = vsub.s32 4, %v414
    %v416 = vrot.slane %v383, %v415
    %418 = vbcast.lane.b32.xlu0 %v416, 256
    %v419 = vpop.permute.xlu0 %418
    %v420 = vlaneseq
    %v421 = vshrl.u32 %v420, 7
    %v422 = vsub.s32 5, %v421
    %v423 = vrot.slane %v383, %v422
    %425 = vbcast.lane.b32.xlu0 %v423, 256
    %v426 = vpop.permute.xlu0 %425
    %v427 = vlaneseq
    %v428 = vshrl.u32 %v427, 7
    %v429 = vsub.s32 6, %v428
    %v430 = vrot.slane %v383, %v429
    %432 = vbcast.lane.b32.xlu0 %v430, 256
    %v433 = vpop.permute.xlu0 %432
    %v434 = vlaneseq
    %v435 = vshrl.u32 %v434, 7
    %v436 = vsub.s32 7, %v435
    %v437 = vrot.slane %v383, %v436
    %439 = vbcast.lane.b32.xlu0 %v437, 256
    %v440 = vpop.permute.xlu0 %439
    %vm441 = vcmp.eq.s32.totalorder %v391, %v144
    %vm442 = vcmp.eq.s32.totalorder %v398, %v144
    %vm443 = vcmp.eq.s32.totalorder %v405, %v144
    %vm444 = vcmp.eq.s32.totalorder %v412, %v144
    %vm445 = vcmp.eq.s32.totalorder %v419, %v144
    %vm446 = vcmp.eq.s32.totalorder %v426, %v144
    %vm447 = vcmp.eq.s32.totalorder %v433, %v144
    %vm448 = vcmp.eq.s32.totalorder %v440, %v144
    %v449 = vsel %vm441, 1, 0
    %v450 = vsel %vm442, 1, 0
    %v451 = vsel %vm443, 1, 0
    %v452 = vsel %vm444, 1, 0
    %v453 = vsel %vm445, 1, 0
    %v454 = vsel %vm446, 1, 0
    %v455 = vsel %vm447, 1, 0
    %v456 = vsel %vm448, 1, 0
    %v457 = vcvt.s32.f32 %v449
    %v458 = vcvt.s32.f32 %v450
    %v459 = vcvt.s32.f32 %v451
    %v460 = vcvt.s32.f32 %v452
    %v461 = vcvt.s32.f32 %v453
    %v462 = vcvt.s32.f32 %v454
    %v463 = vcvt.s32.f32 %v455
    %v464 = vcvt.s32.f32 %v456
    %v465 = vlaneseq
    %v466 = vshrl.u32 %v465, 7
    %v467 = vsub.s32 0, %v466
    %v468 = vrot.slane %v384, %v467
    %470 = vbcast.lane.b32.xlu0 %v468, 256
    %v471 = vpop.permute.xlu0 %470
    %v472 = vlaneseq
    %v473 = vshrl.u32 %v472, 7
    %v474 = vsub.s32 1, %v473
    %v475 = vrot.slane %v384, %v474
    %477 = vbcast.lane.b32.xlu0 %v475, 256
    %v478 = vpop.permute.xlu0 %477
    %v479 = vlaneseq
    %v480 = vshrl.u32 %v479, 7
    %v481 = vsub.s32 2, %v480
    %v482 = vrot.slane %v384, %v481
    %484 = vbcast.lane.b32.xlu0 %v482, 256
    %v485 = vpop.permute.xlu0 %484
    %v486 = vlaneseq
    %v487 = vshrl.u32 %v486, 7
    %v488 = vsub.s32 3, %v487
    %v489 = vrot.slane %v384, %v488
    %491 = vbcast.lane.b32.xlu0 %v489, 256
    %v492 = vpop.permute.xlu0 %491
    %v493 = vlaneseq
    %v494 = vshrl.u32 %v493, 7
    %v495 = vsub.s32 4, %v494
    %v496 = vrot.slane %v384, %v495
    %498 = vbcast.lane.b32.xlu0 %v496, 256
    %v499 = vpop.permute.xlu0 %498
    %v500 = vlaneseq
    %v501 = vshrl.u32 %v500, 7
    %v502 = vsub.s32 5, %v501
    %v503 = vrot.slane %v384, %v502
    %505 = vbcast.lane.b32.xlu0 %v503, 256
    %v506 = vpop.permute.xlu0 %505
    %v507 = vlaneseq
    %v508 = vshrl.u32 %v507, 7
    %v509 = vsub.s32 6, %v508
    %v510 = vrot.slane %v384, %v509
    %512 = vbcast.lane.b32.xlu0 %v510, 256
    %v513 = vpop.permute.xlu0 %512
    %v514 = vlaneseq
    %v515 = vshrl.u32 %v514, 7
    %v516 = vsub.s32 7, %v515
    %v517 = vrot.slane %v384, %v516
    %519 = vbcast.lane.b32.xlu0 %v517, 256
    %v520 = vpop.permute.xlu0 %519
    %v521 = vmul.f32 %v457, %v471
    %v522 = vmul.f32 %v458, %v478
    %v523 = vmul.f32 %v459, %v485
    %v524 = vmul.f32 %v460, %v492
    %v525 = vmul.f32 %v461, %v499
    %v526 = vmul.f32 %v462, %v506
    %v527 = vmul.f32 %v463, %v513
    %v528 = vmul.f32 %v464, %v520
    %v529 = vsel %vm233, %v521, 0.0
    %v530 = vrot.slane %v529, 4
    %v531 = vadd.f32 %v529, %v530
    %v532 = vrot.slane %v531, 2
    %v533 = vadd.f32 %v531, %v532
    %v534 = vrot.slane %v533, 1
    %v535 = vadd.f32 %v533, %v534
    %v536 = vsel %vm233, %v522, 0.0
    %v537 = vrot.slane %v536, 4
    %v538 = vadd.f32 %v536, %v537
    %v539 = vrot.slane %v538, 2
    %v540 = vadd.f32 %v538, %v539
    %v541 = vrot.slane %v540, 1
    %v542 = vadd.f32 %v540, %v541
    %v543 = vsel %vm233, %v523, 0.0
    %v544 = vrot.slane %v543, 4
    %v545 = vadd.f32 %v543, %v544
    %v546 = vrot.slane %v545, 2
    %v547 = vadd.f32 %v545, %v546
    %v548 = vrot.slane %v547, 1
    %v549 = vadd.f32 %v547, %v548
    %v550 = vsel %vm233, %v524, 0.0
    %v551 = vrot.slane %v550, 4
    %v552 = vadd.f32 %v550, %v551
    %v553 = vrot.slane %v552, 2
    %v554 = vadd.f32 %v552, %v553
    %v555 = vrot.slane %v554, 1
    %v556 = vadd.f32 %v554, %v555
    %v557 = vsel %vm233, %v525, 0.0
    %v558 = vrot.slane %v557, 4
    %v559 = vadd.f32 %v557, %v558
    %v560 = vrot.slane %v559, 2
    %v561 = vadd.f32 %v559, %v560
    %v562 = vrot.slane %v561, 1
    %v563 = vadd.f32 %v561, %v562
    %v564 = vsel %vm233, %v526, 0.0
    %v565 = vrot.slane %v564, 4
    %v566 = vadd.f32 %v564, %v565
    %v567 = vrot.slane %v566, 2
    %v568 = vadd.f32 %v566, %v567
    %v569 = vrot.slane %v568, 1
    %v570 = vadd.f32 %v568, %v569
    %v571 = vsel %vm233, %v527, 0.0
    %v572 = vrot.slane %v571, 4
    %v573 = vadd.f32 %v571, %v572
    %v574 = vrot.slane %v573, 2
    %v575 = vadd.f32 %v573, %v574
    %v576 = vrot.slane %v575, 1
    %v577 = vadd.f32 %v575, %v576
    %v578 = vsel %vm233, %v528, 0.0
    %v579 = vrot.slane %v578, 4
    %v580 = vadd.f32 %v578, %v579
    %v581 = vrot.slane %v580, 2
    %v582 = vadd.f32 %v580, %v581
    %v583 = vrot.slane %v582, 1
    %v584 = vadd.f32 %v582, %v583
    %v585 = vsel %vm290, %v384, 0.0
    %586 = vadd.xlane.f32.xlu0 %v585
    %v587 = vpop.xlane.xlu0 %586
    %v588 = vmax.f32 %v587, 1e-06
    %v589 = vrcp.pop %v588
    %v590 = vpack.c.bf16 %v535, %v535
    %v591 = vpack.c.bf16 %v542, %v542
    %v592 = vpack.c.bf16 %v549, %v549
    %v593 = vpack.c.bf16 %v556, %v556
    %v594 = vpack.c.bf16 %v563, %v563
    %v595 = vpack.c.bf16 %v570, %v570
    %v596 = vpack.c.bf16 %v577, %v577
    %v597 = vpack.c.bf16 %v584, %v584
    %v606 = vunpack.c.l.b16 %v590
    %v607 = vunpack.c.l.b16 %v591
    %v608 = vunpack.c.l.b16 %v592
    %v609 = vunpack.c.l.b16 %v593
    %v610 = vunpack.c.l.b16 %v594
    %v611 = vunpack.c.l.b16 %v595
    %v612 = vunpack.c.l.b16 %v596
    %v613 = vunpack.c.l.b16 %v597
    %v614 = vsel %vm324, %v607, %v606
    %v615 = vsel %vm326, %v608, %v614
    %v616 = vsel %vm328, %v609, %v615
    %v617 = vsel %vm330, %v610, %v616
    %v618 = vsel %vm332, %v611, %v617
    %v619 = vsel %vm334, %v612, %v618
    %v620 = vsel %vm336, %v613, %v619
    %v621 = vpack.c.b16 %v620, %v620
    %v623 = vsel %vm233, %v621, 0
    %625 = vmatprep.subr.bf16.mxu0 0
    %626 = vmatpush1.bf16.msra.mxu0 %v304
    %627 = vmatprep.subr.bf16.mxu0 0
    %628 = vmatpush1.bf16.msra.mxu0 %v305
    %629 = vmatprep.subr.bf16.mxu0 0
    %630 = vmatpush1.bf16.msra.mxu0 %v306
    %631 = vmatprep.subr.bf16.mxu0 0
    %632 = vmatpush1.bf16.msra.mxu0 %v307
    %633 = vmatprep.subr.bf16.mxu0 0
    %634 = vmatpush1.bf16.msra.mxu0 0
    %635 = vmatprep.subr.bf16.mxu0 0
    %636 = vmatpush1.bf16.msra.mxu0 0
    %637 = vmatprep.subr.bf16.mxu0 0
    %638 = vmatpush1.bf16.msra.mxu0 0
    %639 = vmatprep.subr.bf16.mxu0 0
    %640 = vmatpush1.bf16.msra.mxu0 0
    %641 = vmatprep.subr.bf16.mxu0 0
    %642 = vmatpush1.bf16.msra.mxu0 0
    %643 = vmatprep.subr.bf16.mxu0 0
    %644 = vmatpush1.bf16.msra.mxu0 0
    %645 = vmatprep.subr.bf16.mxu0 0
    %646 = vmatpush1.bf16.msra.mxu0 0
    %647 = vmatprep.subr.bf16.mxu0 0
    %648 = vmatpush1.bf16.msra.mxu0 0
    %649 = vmatprep.subr.bf16.mxu0 0
    %650 = vmatpush1.bf16.msra.mxu0 0
    %651 = vmatprep.subr.bf16.mxu0 0
    %652 = vmatpush1.bf16.msra.mxu0 0
    %653 = vmatprep.subr.bf16.mxu0 0
    %654 = vmatpush1.bf16.msra.mxu0 0
    %655 = vmatprep.subr.bf16.mxu0 0
    %656 = vmatpush1.bf16.msra.mxu0 0
    %657 = vmatprep.mubr.bf16.mxu0 0
    %658 = vmatmul.mubr.bf16.gmra.mrb[0].mxu0 %v623
    %v659 = vpop.f32.mrb[0].mxu0
    %v660 = vadd.f32 0.0, %v659
    %v661 = vpop.f32.mrb[0].mxu0
    %v662 = vpop.f32.mrb[0].mxu0
    %v663 = vpop.f32.mrb[0].mxu0
    %664 = vdwg.mxu0
    %v665 = vmul.f32 %v660, %v589
    %v666 = vld [vmem:[%s9] sm:$0xff]
    %v667 = vld [vmem:[%s9 + $0x8] sm:$0xff]
    %v668 = vld [vmem:[%s9 + $0x10] sm:$0xff]
    %v669 = vld [vmem:[%s9 + $0x18] sm:$0xff]
    %v670 = vpack.c.bf16 %v382, %v382
    %v671 = vpack.c.bf16 %v667, %v666
    %v672 = vpack.c.bf16 %v669, %v668
    %v673 = vld [vmem:[%s10] sm:$0xff]
    %v674 = vld [vmem:[%s10 + $0x8] sm:$0xff]
    %v675 = vld [vmem:[%s10 + $0x10] sm:$0xff]
    %v676 = vld [vmem:[%s10 + $0x18] sm:$0xff]
    %v677 = vpack.c.bf16 %v665, %v665
    %v678 = vpack.c.bf16 %v674, %v673
    %v679 = vpack.c.bf16 %v676, %v675
    %vm680 = vcmask 261120
    %v682 = vsel %vm680, %v677, 0
    %684 = vmatprep.subr.bf16.mxu0 0
    %685 = vmatpush1.bf16.msra.mxu0 %v678
    %686 = vmatprep.subr.bf16.mxu0 0
    %687 = vmatpush1.bf16.msra.mxu0 %v679
    %688 = vmatprep.subr.bf16.mxu0 0
    %689 = vmatpush1.bf16.msra.mxu0 0
    %690 = vmatprep.subr.bf16.mxu0 0
    %691 = vmatpush1.bf16.msra.mxu0 0
    %692 = vmatprep.subr.bf16.mxu0 0
    %693 = vmatpush1.bf16.msra.mxu0 0
    %694 = vmatprep.subr.bf16.mxu0 0
    %695 = vmatpush1.bf16.msra.mxu0 0
    %696 = vmatprep.subr.bf16.mxu0 0
    %697 = vmatpush1.bf16.msra.mxu0 0
    %698 = vmatprep.subr.bf16.mxu0 0
    %699 = vmatpush1.bf16.msra.mxu0 0
    %700 = vmatprep.subr.bf16.mxu0 0
    %701 = vmatpush1.bf16.msra.mxu0 0
    %702 = vmatprep.subr.bf16.mxu0 0
    %703 = vmatpush1.bf16.msra.mxu0 0
    %704 = vmatprep.subr.bf16.mxu0 0
    %705 = vmatpush1.bf16.msra.mxu0 0
    %706 = vmatprep.subr.bf16.mxu0 0
    %707 = vmatpush1.bf16.msra.mxu0 0
    %708 = vmatprep.subr.bf16.mxu0 0
    %709 = vmatpush1.bf16.msra.mxu0 0
    %710 = vmatprep.subr.bf16.mxu0 0
    %711 = vmatpush1.bf16.msra.mxu0 0
    %712 = vmatprep.subr.bf16.mxu0 0
    %713 = vmatpush1.bf16.msra.mxu0 0
    %714 = vmatprep.subr.bf16.mxu0 0
    %715 = vmatpush1.bf16.msra.mxu0 0
    %716 = vmatprep.mubr.bf16.mxu0 0
    %717 = vmatmul.mubr.bf16.gmra.mrb[0].mxu0 %v682
    %v718 = vpop.f32.mrb[0].mxu0
    %v719 = vadd.f32 0.0, %v718
    %v720 = vpop.f32.mrb[0].mxu0
    %v721 = vpop.f32.mrb[0].mxu0
    %v722 = vpop.f32.mrb[0].mxu0
    %723 = vdwg.mxu0
    %v725 = vsel %vm680, %v670, 0
    %727 = vmatprep.subr.bf16.mxu0 0
    %728 = vmatpush1.bf16.msra.mxu0 %v671
    %729 = vmatprep.subr.bf16.mxu0 0
    %730 = vmatpush1.bf16.msra.mxu0 %v672
    %731 = vmatprep.subr.bf16.mxu0 0
    %732 = vmatpush1.bf16.msra.mxu0 0
    %733 = vmatprep.subr.bf16.mxu0 0
    %734 = vmatpush1.bf16.msra.mxu0 0
    %735 = vmatprep.subr.bf16.mxu0 0
    %736 = vmatpush1.bf16.msra.mxu0 0
    %737 = vmatprep.subr.bf16.mxu0 0
    %738 = vmatpush1.bf16.msra.mxu0 0
    %739 = vmatprep.subr.bf16.mxu0 0
    %740 = vmatpush1.bf16.msra.mxu0 0
    %741 = vmatprep.subr.bf16.mxu0 0
    %742 = vmatpush1.bf16.msra.mxu0 0
    %743 = vmatprep.subr.bf16.mxu0 0
    %744 = vmatpush1.bf16.msra.mxu0 0
    %745 = vmatprep.subr.bf16.mxu0 0
    %746 = vmatpush1.bf16.msra.mxu0 0
    %747 = vmatprep.subr.bf16.mxu0 0
    %748 = vmatpush1.bf16.msra.mxu0 0
    %749 = vmatprep.subr.bf16.mxu0 0
    %750 = vmatpush1.bf16.msra.mxu0 0
    %751 = vmatprep.subr.bf16.mxu0 0
    %752 = vmatpush1.bf16.msra.mxu0 0
    %753 = vmatprep.subr.bf16.mxu0 0
    %754 = vmatpush1.bf16.msra.mxu0 0
    %755 = vmatprep.subr.bf16.mxu0 0
    %756 = vmatpush1.bf16.msra.mxu0 0
    %757 = vmatprep.subr.bf16.mxu0 0
    %758 = vmatpush1.bf16.msra.mxu0 0
    %759 = vmatprep.mubr.bf16.mxu0 0
    %760 = vmatmul.mubr.bf16.gmra.mrb[0].mxu0 %v725
    %v761 = vpop.f32.mrb[0].mxu0
    %v762 = vadd.f32 %v719, %v761
    %v763 = vpop.f32.mrb[0].mxu0
    %v764 = vpop.f32.mrb[0].mxu0
    %v765 = vpop.f32.mrb[0].mxu0
    %766 = vdwg.mxu0
    %v767 = vld [vmem:[%s11] sm:$0x1]
    %v769 = vlaneseq
    %v770 = vshrl.u32 %v769, 7
    %v771 = vsub.s32 0, %v770
    %v772 = vrot.slane %v767, %v771
    %v774 = vadd.f32 %v762, %v772
    %v775 = vtanh.pop %v774
    %v776 = vld [vmem:[%s12] sm:$0xff]
    %v777 = vld [vmem:[%s12 + $0x8] sm:$0xff]
    %v778 = vld [vmem:[%s12 + $0x10] sm:$0xff]
    %v779 = vld [vmem:[%s12 + $0x18] sm:$0xff]
    %v780 = vpack.c.bf16 %v775, %v775
    %v781 = vpack.c.bf16 %v777, %v776
    %v782 = vpack.c.bf16 %v779, %v778
    %v783 = vld [vmem:[%s13] sm:$0x1]
    %v785 = vlaneseq
    %v786 = vshrl.u32 %v785, 7
    %v787 = vsub.s32 0, %v786
    %v788 = vrot.slane %v783, %v787
    %v791 = vsel %vm680, %v780, 0
    %793 = vmatprep.subr.bf16.mxu0 0
    %794 = vmatpush1.bf16.msra.mxu0 %v781
    %795 = vmatprep.subr.bf16.mxu0 0
    %796 = vmatpush1.bf16.msra.mxu0 %v782
    %797 = vmatprep.subr.bf16.mxu0 0
    %798 = vmatpush1.bf16.msra.mxu0 0
    %799 = vmatprep.subr.bf16.mxu0 0
    %800 = vmatpush1.bf16.msra.mxu0 0
    %801 = vmatprep.subr.bf16.mxu0 0
    %802 = vmatpush1.bf16.msra.mxu0 0
    %803 = vmatprep.subr.bf16.mxu0 0
    %804 = vmatpush1.bf16.msra.mxu0 0
    %805 = vmatprep.subr.bf16.mxu0 0
    %806 = vmatpush1.bf16.msra.mxu0 0
    %807 = vmatprep.subr.bf16.mxu0 0
    %808 = vmatpush1.bf16.msra.mxu0 0
    %809 = vmatprep.subr.bf16.mxu0 0
    %810 = vmatpush1.bf16.msra.mxu0 0
    %811 = vmatprep.subr.bf16.mxu0 0
    %812 = vmatpush1.bf16.msra.mxu0 0
    %813 = vmatprep.subr.bf16.mxu0 0
    %814 = vmatpush1.bf16.msra.mxu0 0
    %815 = vmatprep.subr.bf16.mxu0 0
    %816 = vmatpush1.bf16.msra.mxu0 0
    %817 = vmatprep.subr.bf16.mxu0 0
    %818 = vmatpush1.bf16.msra.mxu0 0
    %819 = vmatprep.subr.bf16.mxu0 0
    %820 = vmatpush1.bf16.msra.mxu0 0
    %821 = vmatprep.subr.bf16.mxu0 0
    %822 = vmatpush1.bf16.msra.mxu0 0
    %823 = vmatprep.subr.bf16.mxu0 0
    %824 = vmatpush1.bf16.msra.mxu0 0
    %825 = vmatprep.mubr.bf16.mxu0 0
    %826 = vmatmul.mubr.bf16.gmra.mrb[0].mxu0 %v791
    %v827 = vpop.f32.mrb[0].mxu0
    %v828 = vadd.f32 %v788, %v827
    %v829 = vpop.f32.mrb[0].mxu0
    %v830 = vpop.f32.mrb[0].mxu0
    %v831 = vpop.f32.mrb[0].mxu0
    %832 = vdwg.mxu0
    %v833 = vld [vmem:[%s5] sm:$0x1]
    %v834 = vlaneseq
    %v835 = vshrl.u32 %v834, 7
    %v836 = vadd.s32 %v835, 8
    %v837 = vadd.s32 %v835, 16
    %v838 = vadd.s32 %v835, 24
    %v839 = vadd.s32 %v835, 32
    %v840 = vadd.s32 %v835, 40
    %v841 = vadd.s32 %v835, 48
    %v842 = vadd.s32 %v835, 56
    %v843 = vadd.s32 %v835, 64
    %v844 = vadd.s32 %v835, 72
    %v845 = vadd.s32 %v835, 80
    %v846 = vadd.s32 %v835, 88
    %v847 = vadd.s32 %v835, 96
    %v848 = vadd.s32 %v835, 104
    %v849 = vadd.s32 %v835, 112
    %v850 = vadd.s32 %v835, 120
    %v851 = vlaneseq
    %v852 = vshrl.u32 %v851, 7
    %v853 = vsub.s32 0, %v852
    %v854 = vrot.slane %v833, %v853
    %vm855 = vcmp.eq.s32.totalorder %v835, %v854
    %vm856 = vcmp.eq.s32.totalorder %v836, %v854
    %vm857 = vcmp.eq.s32.totalorder %v837, %v854
    %vm858 = vcmp.eq.s32.totalorder %v838, %v854
    %vm859 = vcmp.eq.s32.totalorder %v839, %v854
    %vm860 = vcmp.eq.s32.totalorder %v840, %v854
    %vm861 = vcmp.eq.s32.totalorder %v841, %v854
    %vm862 = vcmp.eq.s32.totalorder %v842, %v854
    %vm863 = vcmp.eq.s32.totalorder %v843, %v854
    %vm864 = vcmp.eq.s32.totalorder %v844, %v854
    %vm865 = vcmp.eq.s32.totalorder %v845, %v854
    %vm866 = vcmp.eq.s32.totalorder %v846, %v854
    %vm867 = vcmp.eq.s32.totalorder %v847, %v854
    %vm868 = vcmp.eq.s32.totalorder %v848, %v854
    %vm869 = vcmp.eq.s32.totalorder %v849, %v854
    %vm870 = vcmp.eq.s32.totalorder %v850, %v854
    %v871 = vsel %vm855, 1, 0
    %v872 = vsel %vm856, 1, 0
    %v873 = vsel %vm857, 1, 0
    %v874 = vsel %vm858, 1, 0
    %v875 = vsel %vm859, 1, 0
    %v876 = vsel %vm860, 1, 0
    %v877 = vsel %vm861, 1, 0
    %v878 = vsel %vm862, 1, 0
    %v879 = vsel %vm863, 1, 0
    %v880 = vsel %vm864, 1, 0
    %v881 = vsel %vm865, 1, 0
    %v882 = vsel %vm866, 1, 0
    %v883 = vsel %vm867, 1, 0
    %v884 = vsel %vm868, 1, 0
    %v885 = vsel %vm869, 1, 0
    %v886 = vsel %vm870, 1, 0
    %v887 = vcvt.s32.f32 %v871
    %v888 = vcvt.s32.f32 %v872
    %v889 = vcvt.s32.f32 %v873
    %v890 = vcvt.s32.f32 %v874
    %v891 = vcvt.s32.f32 %v875
    %v892 = vcvt.s32.f32 %v876
    %v893 = vcvt.s32.f32 %v877
    %v894 = vcvt.s32.f32 %v878
    %v895 = vcvt.s32.f32 %v879
    %v896 = vcvt.s32.f32 %v880
    %v897 = vcvt.s32.f32 %v881
    %v898 = vcvt.s32.f32 %v882
    %v899 = vcvt.s32.f32 %v883
    %v900 = vcvt.s32.f32 %v884
    %v901 = vcvt.s32.f32 %v885
    %v902 = vcvt.s32.f32 %v886
    %v903 = vsel %vm290, %v887, 0.0
    %904 = vadd.xlane.f32.xlu0 %v903
    %v905 = vpop.xlane.xlu0 %904
    %v906 = vsel %vm290, %v888, 0.0
    %907 = vadd.xlane.f32.xlu0 %v906
    %v908 = vpop.xlane.xlu0 %907
    %v909 = vsel %vm290, %v889, 0.0
    %910 = vadd.xlane.f32.xlu0 %v909
    %v911 = vpop.xlane.xlu0 %910
    %v912 = vsel %vm290, %v890, 0.0
    %913 = vadd.xlane.f32.xlu0 %v912
    %v914 = vpop.xlane.xlu0 %913
    %v915 = vsel %vm290, %v891, 0.0
    %916 = vadd.xlane.f32.xlu0 %v915
    %v917 = vpop.xlane.xlu0 %916
    %v918 = vsel %vm290, %v892, 0.0
    %919 = vadd.xlane.f32.xlu0 %v918
    %v920 = vpop.xlane.xlu0 %919
    %v921 = vsel %vm290, %v893, 0.0
    %922 = vadd.xlane.f32.xlu0 %v921
    %v923 = vpop.xlane.xlu0 %922
    %v924 = vsel %vm290, %v894, 0.0
    %925 = vadd.xlane.f32.xlu0 %v924
    %v926 = vpop.xlane.xlu0 %925
    %v927 = vsel %vm290, %v895, 0.0
    %928 = vadd.xlane.f32.xlu0 %v927
    %v929 = vpop.xlane.xlu0 %928
    %v930 = vsel %vm290, %v896, 0.0
    %931 = vadd.xlane.f32.xlu0 %v930
    %v932 = vpop.xlane.xlu0 %931
    %v933 = vsel %vm290, %v897, 0.0
    %934 = vadd.xlane.f32.xlu0 %v933
    %v935 = vpop.xlane.xlu0 %934
    %v936 = vsel %vm290, %v898, 0.0
    %937 = vadd.xlane.f32.xlu0 %v936
    %v938 = vpop.xlane.xlu0 %937
    %v939 = vsel %vm290, %v899, 0.0
    %940 = vadd.xlane.f32.xlu0 %v939
    %v941 = vpop.xlane.xlu0 %940
    %v942 = vsel %vm290, %v900, 0.0
    %943 = vadd.xlane.f32.xlu0 %v942
    %v944 = vpop.xlane.xlu0 %943
    %v945 = vsel %vm290, %v901, 0.0
    %946 = vadd.xlane.f32.xlu0 %v945
    %v947 = vpop.xlane.xlu0 %946
    %v948 = vsel %vm290, %v902, 0.0
    %949 = vadd.xlane.f32.xlu0 %v948
    %v950 = vpop.xlane.xlu0 %949
    %v951 = vmax.f32 %v905, 1.0
    %v952 = vmax.f32 %v908, 1.0
    %v953 = vmax.f32 %v911, 1.0
    %v954 = vmax.f32 %v914, 1.0
    %v955 = vmax.f32 %v917, 1.0
    %v956 = vmax.f32 %v920, 1.0
    %v957 = vmax.f32 %v923, 1.0
    %v958 = vmax.f32 %v926, 1.0
    %v959 = vmax.f32 %v929, 1.0
    %v960 = vmax.f32 %v932, 1.0
    %v961 = vmax.f32 %v935, 1.0
    %v962 = vmax.f32 %v938, 1.0
    %v963 = vmax.f32 %v941, 1.0
    %v964 = vmax.f32 %v944, 1.0
    %v965 = vmax.f32 %v947, 1.0
    %v966 = vmax.f32 %v950, 1.0
    %v967 = vrcp.pop %v951
    %v968 = vrcp.pop %v952
    %v969 = vrcp.pop %v953
    %v970 = vrcp.pop %v954
    %v971 = vrcp.pop %v955
    %v972 = vrcp.pop %v956
    %v973 = vrcp.pop %v957
    %v974 = vrcp.pop %v958
    %v975 = vrcp.pop %v959
    %v976 = vrcp.pop %v960
    %v977 = vrcp.pop %v961
    %v978 = vrcp.pop %v962
    %v979 = vrcp.pop %v963
    %v980 = vrcp.pop %v964
    %v981 = vrcp.pop %v965
    %v982 = vrcp.pop %v966
    %v983 = vmul.f32 %v887, %v967
    %v984 = vmul.f32 %v888, %v968
    %v985 = vmul.f32 %v889, %v969
    %v986 = vmul.f32 %v890, %v970
    %v987 = vmul.f32 %v891, %v971
    %v988 = vmul.f32 %v892, %v972
    %v989 = vmul.f32 %v893, %v973
    %v990 = vmul.f32 %v894, %v974
    %v991 = vmul.f32 %v895, %v975
    %v992 = vmul.f32 %v896, %v976
    %v993 = vmul.f32 %v897, %v977
    %v994 = vmul.f32 %v898, %v978
    %v995 = vmul.f32 %v899, %v979
    %v996 = vmul.f32 %v900, %v980
    %v997 = vmul.f32 %v901, %v981
    %v998 = vmul.f32 %v902, %v982
    %v999 = vpack.c.bf16 %v984, %v983
    %v1000 = vpack.c.bf16 %v986, %v985
    %v1001 = vpack.c.bf16 %v988, %v987
    %v1002 = vpack.c.bf16 %v990, %v989
    %v1003 = vpack.c.bf16 %v992, %v991
    %v1004 = vpack.c.bf16 %v994, %v993
    %v1005 = vpack.c.bf16 %v996, %v995
    %v1006 = vpack.c.bf16 %v998, %v997
    %v1007 = vpack.c.bf16 %v828, %v828
    %v1009 = vsel %vm290, %v999, 0
    %v1012 = vsel %vm290, %v1000, 0
    %v1015 = vsel %vm290, %v1001, 0
    %v1018 = vsel %vm290, %v1002, 0
    %v1021 = vsel %vm290, %v1003, 0
    %v1024 = vsel %vm290, %v1004, 0
    %v1027 = vsel %vm290, %v1005, 0
    %v1030 = vsel %vm290, %v1006, 0
    %vm1032 = vcmask 1043456
    %v1034 = vsel %vm1032, %v1007, 0
    %1036 = vmatprep.subr.bf16.mxu0 0
    %1037 = vmatpush1.bf16.msra.mxu0 %v1034
    %1038 = vmatprep.subr.bf16.mxu0 0
    %1039 = vmatpush1.bf16.msra.mxu0 0
    %1040 = vmatprep.subr.bf16.mxu0 0
    %1041 = vmatpush1.bf16.msra.mxu0 0
    %1042 = vmatprep.subr.bf16.mxu0 0
    %1043 = vmatpush1.bf16.msra.mxu0 0
    %1044 = vmatprep.subr.bf16.mxu0 0
    %1045 = vmatpush1.bf16.msra.mxu0 0
    %1046 = vmatprep.subr.bf16.mxu0 0
    %1047 = vmatpush1.bf16.msra.mxu0 0
    %1048 = vmatprep.subr.bf16.mxu0 0
    %1049 = vmatpush1.bf16.msra.mxu0 0
    %1050 = vmatprep.subr.bf16.mxu0 0
    %1051 = vmatpush1.bf16.msra.mxu0 0
    %1052 = vmatprep.subr.bf16.mxu0 0
    %1053 = vmatpush1.bf16.msra.mxu0 0
    %1054 = vmatprep.subr.bf16.mxu0 0
    %1055 = vmatpush1.bf16.msra.mxu0 0
    %1056 = vmatprep.subr.bf16.mxu0 0
    %1057 = vmatpush1.bf16.msra.mxu0 0
    %1058 = vmatprep.subr.bf16.mxu0 0
    %1059 = vmatpush1.bf16.msra.mxu0 0
    %1060 = vmatprep.subr.bf16.mxu0 0
    %1061 = vmatpush1.bf16.msra.mxu0 0
    %1062 = vmatprep.subr.bf16.mxu0 0
    %1063 = vmatpush1.bf16.msra.mxu0 0
    %1064 = vmatprep.subr.bf16.mxu0 0
    %1065 = vmatpush1.bf16.msra.mxu0 0
    %1066 = vmatprep.subr.bf16.mxu0 0
    %1067 = vmatpush1.bf16.msra.mxu0 0
    %1068 = vmatprep.mubr.bf16.mxu0 0
    %1069 = vmatmul.mubr.bf16.gmra.mrb[0].mxu0 %v1009
    %v1070 = vpop.f32.mrb[0].mxu0
    %v1071 = vadd.f32 0.0, %v1070
    %v1072 = vpop.f32.mrb[0].mxu0
    %v1073 = vpop.f32.mrb[0].mxu0
    %v1074 = vadd.f32 0.0, %v1073
    %v1075 = vpop.f32.mrb[0].mxu0
    %1076 = vmatprep.mubr.bf16.mxu0 0
    %1077 = vmatmul.mubr.bf16.gmra.mrb[0].mxu0 %v1012
    %v1078 = vpop.f32.mrb[0].mxu0
    %v1079 = vadd.f32 0.0, %v1078
    %v1080 = vpop.f32.mrb[0].mxu0
    %v1081 = vpop.f32.mrb[0].mxu0
    %v1082 = vadd.f32 0.0, %v1081
    %v1083 = vpop.f32.mrb[0].mxu0
    %1084 = vmatprep.mubr.bf16.mxu0 0
    %1085 = vmatmul.mubr.bf16.gmra.mrb[0].mxu0 %v1015
    %v1086 = vpop.f32.mrb[0].mxu0
    %v1087 = vadd.f32 0.0, %v1086
    %v1088 = vpop.f32.mrb[0].mxu0
    %v1089 = vpop.f32.mrb[0].mxu0
    %v1090 = vadd.f32 0.0, %v1089
    %v1091 = vpop.f32.mrb[0].mxu0
    %1092 = vmatprep.mubr.bf16.mxu0 0
    %1093 = vmatmul.mubr.bf16.gmra.mrb[0].mxu0 %v1018
    %v1094 = vpop.f32.mrb[0].mxu0
    %v1095 = vadd.f32 0.0, %v1094
    %v1096 = vpop.f32.mrb[0].mxu0
    %v1097 = vpop.f32.mrb[0].mxu0
    %v1098 = vadd.f32 0.0, %v1097
    %v1099 = vpop.f32.mrb[0].mxu0
    %1100 = vmatprep.mubr.bf16.mxu0 0
    %1101 = vmatmul.mubr.bf16.gmra.mrb[0].mxu0 %v1021
    %v1102 = vpop.f32.mrb[0].mxu0
    %v1103 = vadd.f32 0.0, %v1102
    %v1104 = vpop.f32.mrb[0].mxu0
    %v1105 = vpop.f32.mrb[0].mxu0
    %v1106 = vadd.f32 0.0, %v1105
    %v1107 = vpop.f32.mrb[0].mxu0
    %1108 = vmatprep.mubr.bf16.mxu0 0
    %1109 = vmatmul.mubr.bf16.gmra.mrb[0].mxu0 %v1024
    %v1110 = vpop.f32.mrb[0].mxu0
    %v1111 = vadd.f32 0.0, %v1110
    %v1112 = vpop.f32.mrb[0].mxu0
    %v1113 = vpop.f32.mrb[0].mxu0
    %v1114 = vadd.f32 0.0, %v1113
    %v1115 = vpop.f32.mrb[0].mxu0
    %1116 = vmatprep.mubr.bf16.mxu0 0
    %1117 = vmatmul.mubr.bf16.gmra.mrb[0].mxu0 %v1027
    %v1118 = vpop.f32.mrb[0].mxu0
    %v1119 = vadd.f32 0.0, %v1118
    %v1120 = vpop.f32.mrb[0].mxu0
    %v1121 = vpop.f32.mrb[0].mxu0
    %v1122 = vadd.f32 0.0, %v1121
    %v1123 = vpop.f32.mrb[0].mxu0
    %1124 = vmatprep.mubr.bf16.mxu0 0
    %1125 = vmatmul.mubr.bf16.gmra.mrb[0].mxu0 %v1030
    %v1126 = vpop.f32.mrb[0].mxu0
    %v1127 = vadd.f32 0.0, %v1126
    %v1128 = vpop.f32.mrb[0].mxu0
    %v1129 = vpop.f32.mrb[0].mxu0
    %v1130 = vadd.f32 0.0, %v1129
    %v1131 = vpop.f32.mrb[0].mxu0
    %1132 = vdwg.mxu0
    %v1133 = vld [vmem:[%s14] sm:$0xff]
    %v1134 = vld [vmem:[%s14 + $0x8] sm:$0xff]
    %v1135 = vld [vmem:[%s14 + $0x10] sm:$0xff]
    %v1136 = vld [vmem:[%s14 + $0x18] sm:$0xff]
    %v1137 = vpack.c.bf16 %v1074, %v1071
    %v1138 = vpack.c.bf16 %v1082, %v1079
    %v1139 = vpack.c.bf16 %v1090, %v1087
    %v1140 = vpack.c.bf16 %v1098, %v1095
    %v1141 = vpack.c.bf16 %v1106, %v1103
    %v1142 = vpack.c.bf16 %v1114, %v1111
    %v1143 = vpack.c.bf16 %v1122, %v1119
    %v1144 = vpack.c.bf16 %v1130, %v1127
    %v1145 = vpack.c.bf16 %v1134, %v1133
    %v1146 = vpack.c.bf16 %v1136, %v1135
    %v1147 = vld [vmem:[%s15] sm:$0x1]
    %v1149 = vlaneseq
    %v1150 = vshrl.u32 %v1149, 7
    %v1151 = vsub.s32 0, %v1150
    %v1152 = vrot.slane %v1147, %v1151
    %v1155 = vsel %vm680, %v1137, 0
    %v1158 = vsel %vm680, %v1138, 0
    %v1161 = vsel %vm680, %v1139, 0
    %v1164 = vsel %vm680, %v1140, 0
    %v1167 = vsel %vm680, %v1141, 0
    %v1170 = vsel %vm680, %v1142, 0
    %v1173 = vsel %vm680, %v1143, 0
    %v1176 = vsel %vm680, %v1144, 0
    %1178 = vmatprep.subr.bf16.mxu0 0
    %1179 = vmatpush1.bf16.msra.mxu0 %v1145
    %1180 = vmatprep.subr.bf16.mxu0 0
    %1181 = vmatpush1.bf16.msra.mxu0 %v1146
    %1182 = vmatprep.subr.bf16.mxu0 0
    %1183 = vmatpush1.bf16.msra.mxu0 0
    %1184 = vmatprep.subr.bf16.mxu0 0
    %1185 = vmatpush1.bf16.msra.mxu0 0
    %1186 = vmatprep.subr.bf16.mxu0 0
    %1187 = vmatpush1.bf16.msra.mxu0 0
    %1188 = vmatprep.subr.bf16.mxu0 0
    %1189 = vmatpush1.bf16.msra.mxu0 0
    %1190 = vmatprep.subr.bf16.mxu0 0
    %1191 = vmatpush1.bf16.msra.mxu0 0
    %1192 = vmatprep.subr.bf16.mxu0 0
    %1193 = vmatpush1.bf16.msra.mxu0 0
    %1194 = vmatprep.subr.bf16.mxu0 0
    %1195 = vmatpush1.bf16.msra.mxu0 0
    %1196 = vmatprep.subr.bf16.mxu0 0
    %1197 = vmatpush1.bf16.msra.mxu0 0
    %1198 = vmatprep.subr.bf16.mxu0 0
    %1199 = vmatpush1.bf16.msra.mxu0 0
    %1200 = vmatprep.subr.bf16.mxu0 0
    %1201 = vmatpush1.bf16.msra.mxu0 0
    %1202 = vmatprep.subr.bf16.mxu0 0
    %1203 = vmatpush1.bf16.msra.mxu0 0
    %1204 = vmatprep.subr.bf16.mxu0 0
    %1205 = vmatpush1.bf16.msra.mxu0 0
    %1206 = vmatprep.subr.bf16.mxu0 0
    %1207 = vmatpush1.bf16.msra.mxu0 0
    %1208 = vmatprep.subr.bf16.mxu0 0
    %1209 = vmatpush1.bf16.msra.mxu0 0
    %1210 = vmatprep.mubr.bf16.mxu0 0
    %1211 = vmatmul.mubr.bf16.gmra.mrb[0].mxu0 %v1155
    %v1212 = vpop.f32.mrb[0].mxu0
    %v1213 = vadd.f32 %v1152, %v1212
    %v1214 = vpop.f32.mrb[0].mxu0
    %v1215 = vpop.f32.mrb[0].mxu0
    %v1216 = vadd.f32 %v1152, %v1215
    %v1217 = vpop.f32.mrb[0].mxu0
    %1218 = vmatprep.mubr.bf16.mxu0 0
    %1219 = vmatmul.mubr.bf16.gmra.mrb[0].mxu0 %v1158
    %v1220 = vpop.f32.mrb[0].mxu0
    %v1221 = vadd.f32 %v1152, %v1220
    %v1222 = vpop.f32.mrb[0].mxu0
    %v1223 = vpop.f32.mrb[0].mxu0
    %v1224 = vadd.f32 %v1152, %v1223
    %v1225 = vpop.f32.mrb[0].mxu0
    %1226 = vmatprep.mubr.bf16.mxu0 0
    %1227 = vmatmul.mubr.bf16.gmra.mrb[0].mxu0 %v1161
    %v1228 = vpop.f32.mrb[0].mxu0
    %v1229 = vadd.f32 %v1152, %v1228
    %v1230 = vpop.f32.mrb[0].mxu0
    %v1231 = vpop.f32.mrb[0].mxu0
    %v1232 = vadd.f32 %v1152, %v1231
    %v1233 = vpop.f32.mrb[0].mxu0
    %1234 = vmatprep.mubr.bf16.mxu0 0
    %1235 = vmatmul.mubr.bf16.gmra.mrb[0].mxu0 %v1164
    %v1236 = vpop.f32.mrb[0].mxu0
    %v1237 = vadd.f32 %v1152, %v1236
    %v1238 = vpop.f32.mrb[0].mxu0
    %v1239 = vpop.f32.mrb[0].mxu0
    %v1240 = vadd.f32 %v1152, %v1239
    %v1241 = vpop.f32.mrb[0].mxu0
    %1242 = vmatprep.mubr.bf16.mxu0 0
    %1243 = vmatmul.mubr.bf16.gmra.mrb[0].mxu0 %v1167
    %v1244 = vpop.f32.mrb[0].mxu0
    %v1245 = vadd.f32 %v1152, %v1244
    %v1246 = vpop.f32.mrb[0].mxu0
    %v1247 = vpop.f32.mrb[0].mxu0
    %v1248 = vadd.f32 %v1152, %v1247
    %v1249 = vpop.f32.mrb[0].mxu0
    %1250 = vmatprep.mubr.bf16.mxu0 0
    %1251 = vmatmul.mubr.bf16.gmra.mrb[0].mxu0 %v1170
    %v1252 = vpop.f32.mrb[0].mxu0
    %v1253 = vadd.f32 %v1152, %v1252
    %v1254 = vpop.f32.mrb[0].mxu0
    %v1255 = vpop.f32.mrb[0].mxu0
    %v1256 = vadd.f32 %v1152, %v1255
    %v1257 = vpop.f32.mrb[0].mxu0
    %1258 = vmatprep.mubr.bf16.mxu0 0
    %1259 = vmatmul.mubr.bf16.gmra.mrb[0].mxu0 %v1173
    %v1260 = vpop.f32.mrb[0].mxu0
    %v1261 = vadd.f32 %v1152, %v1260
    %v1262 = vpop.f32.mrb[0].mxu0
    %v1263 = vpop.f32.mrb[0].mxu0
    %v1264 = vadd.f32 %v1152, %v1263
    %v1265 = vpop.f32.mrb[0].mxu0
    %1266 = vmatprep.mubr.bf16.mxu0 0
    %1267 = vmatmul.mubr.bf16.gmra.mrb[0].mxu0 %v1176
    %v1268 = vpop.f32.mrb[0].mxu0
    %v1269 = vadd.f32 %v1152, %v1268
    %v1270 = vpop.f32.mrb[0].mxu0
    %v1271 = vpop.f32.mrb[0].mxu0
    %v1272 = vadd.f32 %v1152, %v1271
    %v1273 = vpop.f32.mrb[0].mxu0
    %1274 = vdwg.mxu0
    %v1275 = vmax.f32 %v1213, 0.0
    %v1276 = vmax.f32 %v1216, 0.0
    %v1277 = vmax.f32 %v1221, 0.0
    %v1278 = vmax.f32 %v1224, 0.0
    %v1279 = vmax.f32 %v1229, 0.0
    %v1280 = vmax.f32 %v1232, 0.0
    %v1281 = vmax.f32 %v1237, 0.0
    %v1282 = vmax.f32 %v1240, 0.0
    %v1283 = vmax.f32 %v1245, 0.0
    %v1284 = vmax.f32 %v1248, 0.0
    %v1285 = vmax.f32 %v1253, 0.0
    %v1286 = vmax.f32 %v1256, 0.0
    %v1287 = vmax.f32 %v1261, 0.0
    %v1288 = vmax.f32 %v1264, 0.0
    %v1289 = vmax.f32 %v1269, 0.0
    %v1290 = vmax.f32 %v1272, 0.0
    %v1291 = vld [vmem:[%s16] sm:$0xff]
    %v1292 = vld [vmem:[%s16 + $0x8] sm:$0xff]
    %v1293 = vld [vmem:[%s16 + $0x10] sm:$0xff]
    %v1294 = vld [vmem:[%s16 + $0x18] sm:$0xff]
    %v1295 = vld [vmem:[%s16 + $0x20] sm:$0xff]
    %v1296 = vld [vmem:[%s16 + $0x28] sm:$0xff]
    %v1297 = vld [vmem:[%s16 + $0x30] sm:$0xff]
    %v1298 = vld [vmem:[%s16 + $0x38] sm:$0xff]
    %v1299 = vpack.c.bf16 %v1276, %v1275
    %v1300 = vpack.c.bf16 %v1278, %v1277
    %v1301 = vpack.c.bf16 %v1280, %v1279
    %v1302 = vpack.c.bf16 %v1282, %v1281
    %v1303 = vpack.c.bf16 %v1284, %v1283
    %v1304 = vpack.c.bf16 %v1286, %v1285
    %v1305 = vpack.c.bf16 %v1288, %v1287
    %v1306 = vpack.c.bf16 %v1290, %v1289
    %v1307 = vpack.c.bf16 %v1292, %v1291
    %v1308 = vpack.c.bf16 %v1294, %v1293
    %v1309 = vpack.c.bf16 %v1296, %v1295
    %v1310 = vpack.c.bf16 %v1298, %v1297
    %v1311 = vld [vmem:[%s17] sm:$0x1]
    %v1313 = vlaneseq
    %v1314 = vshrl.u32 %v1313, 7
    %v1315 = vsub.s32 0, %v1314
    %v1316 = vrot.slane %v1311, %v1315
    %v1319 = vsel %vm233, %v1299, 0
    %v1322 = vsel %vm233, %v1300, 0
    %v1325 = vsel %vm233, %v1301, 0
    %v1328 = vsel %vm233, %v1302, 0
    %v1331 = vsel %vm233, %v1303, 0
    %v1334 = vsel %vm233, %v1304, 0
    %v1337 = vsel %vm233, %v1305, 0
    %v1340 = vsel %vm233, %v1306, 0
    %1342 = vmatprep.subr.bf16.mxu0 0
    %1343 = vmatpush1.bf16.msra.mxu0 %v1307
    %1344 = vmatprep.subr.bf16.mxu0 0
    %1345 = vmatpush1.bf16.msra.mxu0 %v1308
    %1346 = vmatprep.subr.bf16.mxu0 0
    %1347 = vmatpush1.bf16.msra.mxu0 %v1309
    %1348 = vmatprep.subr.bf16.mxu0 0
    %1349 = vmatpush1.bf16.msra.mxu0 %v1310
    %1350 = vmatprep.subr.bf16.mxu0 0
    %1351 = vmatpush1.bf16.msra.mxu0 0
    %1352 = vmatprep.subr.bf16.mxu0 0
    %1353 = vmatpush1.bf16.msra.mxu0 0
    %1354 = vmatprep.subr.bf16.mxu0 0
    %1355 = vmatpush1.bf16.msra.mxu0 0
    %1356 = vmatprep.subr.bf16.mxu0 0
    %1357 = vmatpush1.bf16.msra.mxu0 0
    %1358 = vmatprep.subr.bf16.mxu0 0
    %1359 = vmatpush1.bf16.msra.mxu0 0
    %1360 = vmatprep.subr.bf16.mxu0 0
    %1361 = vmatpush1.bf16.msra.mxu0 0
    %1362 = vmatprep.subr.bf16.mxu0 0
    %1363 = vmatpush1.bf16.msra.mxu0 0
    %1364 = vmatprep.subr.bf16.mxu0 0
    %1365 = vmatpush1.bf16.msra.mxu0 0
    %1366 = vmatprep.subr.bf16.mxu0 0
    %1367 = vmatpush1.bf16.msra.mxu0 0
    %1368 = vmatprep.subr.bf16.mxu0 0
    %1369 = vmatpush1.bf16.msra.mxu0 0
    %1370 = vmatprep.subr.bf16.mxu0 0
    %1371 = vmatpush1.bf16.msra.mxu0 0
    %1372 = vmatprep.subr.bf16.mxu0 0
    %1373 = vmatpush1.bf16.msra.mxu0 0
    %1374 = vmatprep.mubr.bf16.mxu0 0
    %1375 = vmatmul.mubr.bf16.gmra.mrb[0].mxu0 %v1319
    %v1376 = vpop.f32.mrb[0].mxu0
    %v1377 = vadd.f32 %v1316, %v1376
    %v1378 = vpop.f32.mrb[0].mxu0
    %v1379 = vpop.f32.mrb[0].mxu0
    %v1380 = vadd.f32 %v1316, %v1379
    %v1381 = vpop.f32.mrb[0].mxu0
    %1382 = vmatprep.mubr.bf16.mxu0 0
    %1383 = vmatmul.mubr.bf16.gmra.mrb[0].mxu0 %v1322
    %v1384 = vpop.f32.mrb[0].mxu0
    %v1385 = vadd.f32 %v1316, %v1384
    %v1386 = vpop.f32.mrb[0].mxu0
    %v1387 = vpop.f32.mrb[0].mxu0
    %v1388 = vadd.f32 %v1316, %v1387
    %v1389 = vpop.f32.mrb[0].mxu0
    %1390 = vmatprep.mubr.bf16.mxu0 0
    %1391 = vmatmul.mubr.bf16.gmra.mrb[0].mxu0 %v1325
    %v1392 = vpop.f32.mrb[0].mxu0
    %v1393 = vadd.f32 %v1316, %v1392
    %v1394 = vpop.f32.mrb[0].mxu0
    %v1395 = vpop.f32.mrb[0].mxu0
    %v1396 = vadd.f32 %v1316, %v1395
    %v1397 = vpop.f32.mrb[0].mxu0
    %1398 = vmatprep.mubr.bf16.mxu0 0
    %1399 = vmatmul.mubr.bf16.gmra.mrb[0].mxu0 %v1328
    %v1400 = vpop.f32.mrb[0].mxu0
    %v1401 = vadd.f32 %v1316, %v1400
    %v1402 = vpop.f32.mrb[0].mxu0
    %v1403 = vpop.f32.mrb[0].mxu0
    %v1404 = vadd.f32 %v1316, %v1403
    %v1405 = vpop.f32.mrb[0].mxu0
    %1406 = vmatprep.mubr.bf16.mxu0 0
    %1407 = vmatmul.mubr.bf16.gmra.mrb[0].mxu0 %v1331
    %v1408 = vpop.f32.mrb[0].mxu0
    %v1409 = vadd.f32 %v1316, %v1408
    %v1410 = vpop.f32.mrb[0].mxu0
    %v1411 = vpop.f32.mrb[0].mxu0
    %v1412 = vadd.f32 %v1316, %v1411
    %v1413 = vpop.f32.mrb[0].mxu0
    %1414 = vmatprep.mubr.bf16.mxu0 0
    %1415 = vmatmul.mubr.bf16.gmra.mrb[0].mxu0 %v1334
    %v1416 = vpop.f32.mrb[0].mxu0
    %v1417 = vadd.f32 %v1316, %v1416
    %v1418 = vpop.f32.mrb[0].mxu0
    %v1419 = vpop.f32.mrb[0].mxu0
    %v1420 = vadd.f32 %v1316, %v1419
    %v1421 = vpop.f32.mrb[0].mxu0
    %1422 = vmatprep.mubr.bf16.mxu0 0
    %1423 = vmatmul.mubr.bf16.gmra.mrb[0].mxu0 %v1337
    %v1424 = vpop.f32.mrb[0].mxu0
    %v1425 = vadd.f32 %v1316, %v1424
    %v1426 = vpop.f32.mrb[0].mxu0
    %v1427 = vpop.f32.mrb[0].mxu0
    %v1428 = vadd.f32 %v1316, %v1427
    %v1429 = vpop.f32.mrb[0].mxu0
    %1430 = vmatprep.mubr.bf16.mxu0 0
    %1431 = vmatmul.mubr.bf16.gmra.mrb[0].mxu0 %v1340
    %v1432 = vpop.f32.mrb[0].mxu0
    %v1433 = vadd.f32 %v1316, %v1432
    %v1434 = vpop.f32.mrb[0].mxu0
    %v1435 = vpop.f32.mrb[0].mxu0
    %v1436 = vadd.f32 %v1316, %v1435
    %v1437 = vpop.f32.mrb[0].mxu0
    %1438 = vdwg.mxu0
    %v1439 = vld [vmem:[%s18] sm:$0x1]
    %v1440 = vpack.c.bf16 %v1439, %v1439
    %v1441 = vld [vmem:[#allocation2] sm:$0x1]
    %1443 = vset.pattern.permute.xlu0 0
    %1444 = vperm.xlu0 %1443, %v1441
    %v1445 = vpop.permute.xlu0 %1444
    %v1447 = vlaneseq
    %v1448 = vshrl.u32 %v1447, 7
    %v1449 = vsub.s32 0, %v1448
    %v1450 = vrot.slane %v1445, %v1449
    %v1452 = vsel %vm233, %v1440, 0
    %1454 = vmatprep.subr.bf16.mxu0 0
    %1455 = vmatpush1.bf16.xpose.msra.mxu0 %v1319
    %1456 = vmatprep.subr.bf16.mxu0 0
    %1457 = vmatpush1.bf16.xpose.msra.mxu0 %v1322
    %1458 = vmatprep.subr.bf16.mxu0 0
    %1459 = vmatpush1.bf16.xpose.msra.mxu0 %v1325
    %1460 = vmatprep.subr.bf16.mxu0 0
    %1461 = vmatpush1.bf16.xpose.msra.mxu0 %v1328
    %1462 = vmatprep.subr.bf16.mxu0 0
    %1463 = vmatpush1.bf16.xpose.msra.mxu0 %v1331
    %1464 = vmatprep.subr.bf16.mxu0 0
    %1465 = vmatpush1.bf16.xpose.msra.mxu0 %v1334
    %1466 = vmatprep.subr.bf16.mxu0 0
    %1467 = vmatpush1.bf16.xpose.msra.mxu0 %v1337
    %1468 = vmatprep.subr.bf16.mxu0 0
    %1469 = vmatpush1.bf16.xpose.msra.mxu0 %v1340
    %1470 = vmatprep.subr.bf16.mxu0 0
    %1471 = vmatpush1.bf16.xpose.msra.mxu0 0
    %1472 = vmatprep.subr.bf16.mxu0 0
    %1473 = vmatpush1.bf16.xpose.msra.mxu0 0
    %1474 = vmatprep.subr.bf16.mxu0 0
    %1475 = vmatpush1.bf16.xpose.msra.mxu0 0
    %1476 = vmatprep.subr.bf16.mxu0 0
    %1477 = vmatpush1.bf16.xpose.msra.mxu0 0
    %1478 = vmatprep.subr.bf16.mxu0 0
    %1479 = vmatpush1.bf16.xpose.msra.mxu0 0
    %1480 = vmatprep.subr.bf16.mxu0 0
    %1481 = vmatpush1.bf16.xpose.msra.mxu0 0
    %1482 = vmatprep.subr.bf16.mxu0 0
    %1483 = vmatpush1.bf16.xpose.msra.mxu0 0
    %1484 = vmatprep.subr.bf16.mxu0 0
    %1485 = vmatpush1.bf16.xpose.msra.mxu0 0
    %1486 = vmatprep.mubr.bf16.mxu0 0
    %1487 = vmatmul.mubr.bf16.gmra.mrb[0].mxu0 %v1452
    %v1488 = vpop.f32.mrb[0].mxu0
    %v1489 = vadd.f32 %v1450, %v1488
    %v1490 = vpop.f32.mrb[0].mxu0
    %v1491 = vpop.f32.mrb[0].mxu0
    %v1492 = vpop.f32.mrb[0].mxu0
    %1493 = vdwg.mxu0
    %v1494 = vld [vmem:[%s6] sm:$0xff]
    %v1495 = vld [vmem:[%s7] sm:$0xff]
    %v1496 = vlaneseq
    %v1497 = vshrl.u32 %v1496, 7
    %v1498 = vsub.s32 0, %v1497
    %v1499 = vrot.slane %v1494, %v1498
    %1501 = vbcast.lane.b32.xlu0 %v1499, 256
    %v1502 = vpop.permute.xlu0 %1501
    %v1503 = vlaneseq
    %v1504 = vshrl.u32 %v1503, 7
    %v1505 = vsub.s32 1, %v1504
    %v1506 = vrot.slane %v1494, %v1505
    %1508 = vbcast.lane.b32.xlu0 %v1506, 256
    %v1509 = vpop.permute.xlu0 %1508
    %v1510 = vlaneseq
    %v1511 = vshrl.u32 %v1510, 7
    %v1512 = vsub.s32 2, %v1511
    %v1513 = vrot.slane %v1494, %v1512
    %1515 = vbcast.lane.b32.xlu0 %v1513, 256
    %v1516 = vpop.permute.xlu0 %1515
    %v1517 = vlaneseq
    %v1518 = vshrl.u32 %v1517, 7
    %v1519 = vsub.s32 3, %v1518
    %v1520 = vrot.slane %v1494, %v1519
    %1522 = vbcast.lane.b32.xlu0 %v1520, 256
    %v1523 = vpop.permute.xlu0 %1522
    %v1524 = vlaneseq
    %v1525 = vshrl.u32 %v1524, 7
    %v1526 = vsub.s32 4, %v1525
    %v1527 = vrot.slane %v1494, %v1526
    %1529 = vbcast.lane.b32.xlu0 %v1527, 256
    %v1530 = vpop.permute.xlu0 %1529
    %v1531 = vlaneseq
    %v1532 = vshrl.u32 %v1531, 7
    %v1533 = vsub.s32 5, %v1532
    %v1534 = vrot.slane %v1494, %v1533
    %1536 = vbcast.lane.b32.xlu0 %v1534, 256
    %v1537 = vpop.permute.xlu0 %1536
    %v1538 = vlaneseq
    %v1539 = vshrl.u32 %v1538, 7
    %v1540 = vsub.s32 6, %v1539
    %v1541 = vrot.slane %v1494, %v1540
    %1543 = vbcast.lane.b32.xlu0 %v1541, 256
    %v1544 = vpop.permute.xlu0 %1543
    %v1545 = vlaneseq
    %v1546 = vshrl.u32 %v1545, 7
    %v1547 = vsub.s32 7, %v1546
    %v1548 = vrot.slane %v1494, %v1547
    %1550 = vbcast.lane.b32.xlu0 %v1548, 256
    %v1551 = vpop.permute.xlu0 %1550
    %vm1552 = vcmp.eq.s32.totalorder %v1502, %v144
    %vm1553 = vcmp.eq.s32.totalorder %v1509, %v144
    %vm1554 = vcmp.eq.s32.totalorder %v1516, %v144
    %vm1555 = vcmp.eq.s32.totalorder %v1523, %v144
    %vm1556 = vcmp.eq.s32.totalorder %v1530, %v144
    %vm1557 = vcmp.eq.s32.totalorder %v1537, %v144
    %vm1558 = vcmp.eq.s32.totalorder %v1544, %v144
    %vm1559 = vcmp.eq.s32.totalorder %v1551, %v144
    %v1560 = vsel %vm1552, 1, 0
    %v1561 = vsel %vm1553, 1, 0
    %v1562 = vsel %vm1554, 1, 0
    %v1563 = vsel %vm1555, 1, 0
    %v1564 = vsel %vm1556, 1, 0
    %v1565 = vsel %vm1557, 1, 0
    %v1566 = vsel %vm1558, 1, 0
    %v1567 = vsel %vm1559, 1, 0
    %v1568 = vcvt.s32.f32 %v1560
    %v1569 = vcvt.s32.f32 %v1561
    %v1570 = vcvt.s32.f32 %v1562
    %v1571 = vcvt.s32.f32 %v1563
    %v1572 = vcvt.s32.f32 %v1564
    %v1573 = vcvt.s32.f32 %v1565
    %v1574 = vcvt.s32.f32 %v1566
    %v1575 = vcvt.s32.f32 %v1567
    %v1576 = vlaneseq
    %v1577 = vshrl.u32 %v1576, 7
    %v1578 = vsub.s32 0, %v1577
    %v1579 = vrot.slane %v1495, %v1578
    %1581 = vbcast.lane.b32.xlu0 %v1579, 256
    %v1582 = vpop.permute.xlu0 %1581
    %v1583 = vlaneseq
    %v1584 = vshrl.u32 %v1583, 7
    %v1585 = vsub.s32 1, %v1584
    %v1586 = vrot.slane %v1495, %v1585
    %1588 = vbcast.lane.b32.xlu0 %v1586, 256
    %v1589 = vpop.permute.xlu0 %1588
    %v1590 = vlaneseq
    %v1591 = vshrl.u32 %v1590, 7
    %v1592 = vsub.s32 2, %v1591
    %v1593 = vrot.slane %v1495, %v1592
    %1595 = vbcast.lane.b32.xlu0 %v1593, 256
    %v1596 = vpop.permute.xlu0 %1595
    %v1597 = vlaneseq
    %v1598 = vshrl.u32 %v1597, 7
    %v1599 = vsub.s32 3, %v1598
    %v1600 = vrot.slane %v1495, %v1599
    %1602 = vbcast.lane.b32.xlu0 %v1600, 256
    %v1603 = vpop.permute.xlu0 %1602
    %v1604 = vlaneseq
    %v1605 = vshrl.u32 %v1604, 7
    %v1606 = vsub.s32 4, %v1605
    %v1607 = vrot.slane %v1495, %v1606
    %1609 = vbcast.lane.b32.xlu0 %v1607, 256
    %v1610 = vpop.permute.xlu0 %1609
    %v1611 = vlaneseq
    %v1612 = vshrl.u32 %v1611, 7
    %v1613 = vsub.s32 5, %v1612
    %v1614 = vrot.slane %v1495, %v1613
    %1616 = vbcast.lane.b32.xlu0 %v1614, 256
    %v1617 = vpop.permute.xlu0 %1616
    %v1618 = vlaneseq
    %v1619 = vshrl.u32 %v1618, 7
    %v1620 = vsub.s32 6, %v1619
    %v1621 = vrot.slane %v1495, %v1620
    %1623 = vbcast.lane.b32.xlu0 %v1621, 256
    %v1624 = vpop.permute.xlu0 %1623
    %v1625 = vlaneseq
    %v1626 = vshrl.u32 %v1625, 7
    %v1627 = vsub.s32 7, %v1626
    %v1628 = vrot.slane %v1495, %v1627
    %1630 = vbcast.lane.b32.xlu0 %v1628, 256
    %v1631 = vpop.permute.xlu0 %1630
    %v1632 = vmul.f32 %v1568, %v1582
    %v1633 = vmul.f32 %v1569, %v1589
    %v1634 = vmul.f32 %v1570, %v1596
    %v1635 = vmul.f32 %v1571, %v1603
    %v1636 = vmul.f32 %v1572, %v1610
    %v1637 = vmul.f32 %v1573, %v1617
    %v1638 = vmul.f32 %v1574, %v1624
    %v1639 = vmul.f32 %v1575, %v1631
    %v1640 = vsel %vm233, %v1632, 0.0
    %v1641 = vrot.slane %v1640, 4
    %v1642 = vadd.f32 %v1640, %v1641
    %v1643 = vrot.slane %v1642, 2
    %v1644 = vadd.f32 %v1642, %v1643
    %v1645 = vrot.slane %v1644, 1
    %v1646 = vadd.f32 %v1644, %v1645
    %v1647 = vsel %vm233, %v1633, 0.0
    %v1648 = vrot.slane %v1647, 4
    %v1649 = vadd.f32 %v1647, %v1648
    %v1650 = vrot.slane %v1649, 2
    %v1651 = vadd.f32 %v1649, %v1650
    %v1652 = vrot.slane %v1651, 1
    %v1653 = vadd.f32 %v1651, %v1652
    %v1654 = vsel %vm233, %v1634, 0.0
    %v1655 = vrot.slane %v1654, 4
    %v1656 = vadd.f32 %v1654, %v1655
    %v1657 = vrot.slane %v1656, 2
    %v1658 = vadd.f32 %v1656, %v1657
    %v1659 = vrot.slane %v1658, 1
    %v1660 = vadd.f32 %v1658, %v1659
    %v1661 = vsel %vm233, %v1635, 0.0
    %v1662 = vrot.slane %v1661, 4
    %v1663 = vadd.f32 %v1661, %v1662
    %v1664 = vrot.slane %v1663, 2
    %v1665 = vadd.f32 %v1663, %v1664
    %v1666 = vrot.slane %v1665, 1
    %v1667 = vadd.f32 %v1665, %v1666
    %v1668 = vsel %vm233, %v1636, 0.0
    %v1669 = vrot.slane %v1668, 4
    %v1670 = vadd.f32 %v1668, %v1669
    %v1671 = vrot.slane %v1670, 2
    %v1672 = vadd.f32 %v1670, %v1671
    %v1673 = vrot.slane %v1672, 1
    %v1674 = vadd.f32 %v1672, %v1673
    %v1675 = vsel %vm233, %v1637, 0.0
    %v1676 = vrot.slane %v1675, 4
    %v1677 = vadd.f32 %v1675, %v1676
    %v1678 = vrot.slane %v1677, 2
    %v1679 = vadd.f32 %v1677, %v1678
    %v1680 = vrot.slane %v1679, 1
    %v1681 = vadd.f32 %v1679, %v1680
    %v1682 = vsel %vm233, %v1638, 0.0
    %v1683 = vrot.slane %v1682, 4
    %v1684 = vadd.f32 %v1682, %v1683
    %v1685 = vrot.slane %v1684, 2
    %v1686 = vadd.f32 %v1684, %v1685
    %v1687 = vrot.slane %v1686, 1
    %v1688 = vadd.f32 %v1686, %v1687
    %v1689 = vsel %vm233, %v1639, 0.0
    %v1690 = vrot.slane %v1689, 4
    %v1691 = vadd.f32 %v1689, %v1690
    %v1692 = vrot.slane %v1691, 2
    %v1693 = vadd.f32 %v1691, %v1692
    %v1694 = vrot.slane %v1693, 1
    %v1695 = vadd.f32 %v1693, %v1694
    %v1696 = vsel %vm290, %v1495, 0.0
    %1697 = vadd.xlane.f32.xlu0 %v1696
    %v1698 = vpop.xlane.xlu0 %1697
    %v1699 = vmax.f32 %v1698, 1e-06
    %v1700 = vrcp.pop %v1699
    %v1701 = vpack.c.bf16 %v1646, %v1646
    %v1702 = vpack.c.bf16 %v1653, %v1653
    %v1703 = vpack.c.bf16 %v1660, %v1660
    %v1704 = vpack.c.bf16 %v1667, %v1667
    %v1705 = vpack.c.bf16 %v1674, %v1674
    %v1706 = vpack.c.bf16 %v1681, %v1681
    %v1707 = vpack.c.bf16 %v1688, %v1688
    %v1708 = vpack.c.bf16 %v1695, %v1695
    %v1717 = vunpack.c.l.b16 %v1701
    %v1718 = vunpack.c.l.b16 %v1702
    %v1719 = vunpack.c.l.b16 %v1703
    %v1720 = vunpack.c.l.b16 %v1704
    %v1721 = vunpack.c.l.b16 %v1705
    %v1722 = vunpack.c.l.b16 %v1706
    %v1723 = vunpack.c.l.b16 %v1707
    %v1724 = vunpack.c.l.b16 %v1708
    %v1725 = vsel %vm324, %v1718, %v1717
    %v1726 = vsel %vm326, %v1719, %v1725
    %v1727 = vsel %vm328, %v1720, %v1726
    %v1728 = vsel %vm330, %v1721, %v1727
    %v1729 = vsel %vm332, %v1722, %v1728
    %v1730 = vsel %vm334, %v1723, %v1729
    %v1731 = vsel %vm336, %v1724, %v1730
    %v1732 = vpack.c.b16 %v1731, %v1731
    %v1734 = vsel %vm233, %v1732, 0
    %1736 = vmatprep.subr.bf16.mxu0 0
    %1737 = vmatpush1.bf16.msra.mxu0 %v304
    %1738 = vmatprep.subr.bf16.mxu0 0
    %1739 = vmatpush1.bf16.msra.mxu0 %v305
    %1740 = vmatprep.subr.bf16.mxu0 0
    %1741 = vmatpush1.bf16.msra.mxu0 %v306
    %1742 = vmatprep.subr.bf16.mxu0 0
    %1743 = vmatpush1.bf16.msra.mxu0 %v307
    %1744 = vmatprep.subr.bf16.mxu0 0
    %1745 = vmatpush1.bf16.msra.mxu0 0
    %1746 = vmatprep.subr.bf16.mxu0 0
    %1747 = vmatpush1.bf16.msra.mxu0 0
    %1748 = vmatprep.subr.bf16.mxu0 0
    %1749 = vmatpush1.bf16.msra.mxu0 0
    %1750 = vmatprep.subr.bf16.mxu0 0
    %1751 = vmatpush1.bf16.msra.mxu0 0
    %1752 = vmatprep.subr.bf16.mxu0 0
    %1753 = vmatpush1.bf16.msra.mxu0 0
    %1754 = vmatprep.subr.bf16.mxu0 0
    %1755 = vmatpush1.bf16.msra.mxu0 0
    %1756 = vmatprep.subr.bf16.mxu0 0
    %1757 = vmatpush1.bf16.msra.mxu0 0
    %1758 = vmatprep.subr.bf16.mxu0 0
    %1759 = vmatpush1.bf16.msra.mxu0 0
    %1760 = vmatprep.subr.bf16.mxu0 0
    %1761 = vmatpush1.bf16.msra.mxu0 0
    %1762 = vmatprep.subr.bf16.mxu0 0
    %1763 = vmatpush1.bf16.msra.mxu0 0
    %1764 = vmatprep.subr.bf16.mxu0 0
    %1765 = vmatpush1.bf16.msra.mxu0 0
    %1766 = vmatprep.subr.bf16.mxu0 0
    %1767 = vmatpush1.bf16.msra.mxu0 0
    %1768 = vmatprep.mubr.bf16.mxu0 0
    %1769 = vmatmul.mubr.bf16.gmra.mrb[0].mxu0 %v1734
    %v1770 = vpop.f32.mrb[0].mxu0
    %v1771 = vadd.f32 0.0, %v1770
    %v1772 = vpop.f32.mrb[0].mxu0
    %v1773 = vpop.f32.mrb[0].mxu0
    %v1774 = vpop.f32.mrb[0].mxu0
    %1775 = vdwg.mxu0
    %v1776 = vmul.f32 %v1771, %v1700
    %v1777 = vld [vmem:[%s20] sm:$0xff]
    %v1778 = vld [vmem:[%s20 + $0x8] sm:$0xff]
    %v1779 = vld [vmem:[%s20 + $0x10] sm:$0xff]
    %v1780 = vld [vmem:[%s20 + $0x18] sm:$0xff]
    %v1781 = vpack.c.bf16 %v1776, %v1776
    %v1782 = vpack.c.bf16 %v1778, %v1777
    %v1783 = vpack.c.bf16 %v1780, %v1779
    %v1784 = vld [vmem:[%s21] sm:$0x1]
    %v1786 = vlaneseq
    %v1787 = vshrl.u32 %v1786, 7
    %v1788 = vsub.s32 0, %v1787
    %v1789 = vrot.slane %v1784, %v1788
    %v1792 = vsel %vm680, %v1781, 0
    %1794 = vmatprep.subr.bf16.mxu0 0
    %1795 = vmatpush1.bf16.msra.mxu0 %v1782
    %1796 = vmatprep.subr.bf16.mxu0 0
    %1797 = vmatpush1.bf16.msra.mxu0 %v1783
    %1798 = vmatprep.subr.bf16.mxu0 0
    %1799 = vmatpush1.bf16.msra.mxu0 0
    %1800 = vmatprep.subr.bf16.mxu0 0
    %1801 = vmatpush1.bf16.msra.mxu0 0
    %1802 = vmatprep.subr.bf16.mxu0 0
    %1803 = vmatpush1.bf16.msra.mxu0 0
    %1804 = vmatprep.subr.bf16.mxu0 0
    %1805 = vmatpush1.bf16.msra.mxu0 0
    %1806 = vmatprep.subr.bf16.mxu0 0
    %1807 = vmatpush1.bf16.msra.mxu0 0
    %1808 = vmatprep.subr.bf16.mxu0 0
    %1809 = vmatpush1.bf16.msra.mxu0 0
    %1810 = vmatprep.subr.bf16.mxu0 0
    %1811 = vmatpush1.bf16.msra.mxu0 0
    %1812 = vmatprep.subr.bf16.mxu0 0
    %1813 = vmatpush1.bf16.msra.mxu0 0
    %1814 = vmatprep.subr.bf16.mxu0 0
    %1815 = vmatpush1.bf16.msra.mxu0 0
    %1816 = vmatprep.subr.bf16.mxu0 0
    %1817 = vmatpush1.bf16.msra.mxu0 0
    %1818 = vmatprep.subr.bf16.mxu0 0
    %1819 = vmatpush1.bf16.msra.mxu0 0
    %1820 = vmatprep.subr.bf16.mxu0 0
    %1821 = vmatpush1.bf16.msra.mxu0 0
    %1822 = vmatprep.subr.bf16.mxu0 0
    %1823 = vmatpush1.bf16.msra.mxu0 0
    %1824 = vmatprep.subr.bf16.mxu0 0
    %1825 = vmatpush1.bf16.msra.mxu0 0
    %1826 = vmatprep.mubr.bf16.mxu0 0
    %1827 = vmatmul.mubr.bf16.gmra.mrb[0].mxu0 %v1792
    %v1828 = vpop.f32.mrb[0].mxu0
    %v1829 = vadd.f32 %v1789, %v1828
    %v1830 = vpop.f32.mrb[0].mxu0
    %v1831 = vpop.f32.mrb[0].mxu0
    %v1832 = vpop.f32.mrb[0].mxu0
    %1833 = vdwg.mxu0
    %v1834 = vtanh.pop %v1829
    %vm1835 = vcmp.lt.s32.totalorder %v144, 2
    %v1836 = vsel %vm1835, 0.0, -1e+30
    %v1837 = vpack.c.bf16 %v1834, %v1834
    %v1838 = vpack.c.bf16 %v1380, %v1377
    %v1839 = vpack.c.bf16 %v1388, %v1385
    %v1840 = vpack.c.bf16 %v1396, %v1393
    %v1841 = vpack.c.bf16 %v1404, %v1401
    %v1842 = vpack.c.bf16 %v1412, %v1409
    %v1843 = vpack.c.bf16 %v1420, %v1417
    %v1844 = vpack.c.bf16 %v1428, %v1425
    %v1845 = vpack.c.bf16 %v1436, %v1433
    %v1846 = vlaneseq
    %v1847 = vshrl.u32 %v1846, 7
    %v1848 = vsub.s32 0, %v1847
    %v1849 = vrot.slane %v1489, %v1848
    %v1851 = vsel %vm680, %v1837, 0
    %v1854 = vsel %vm680, %v1838, 0
    %v1857 = vsel %vm680, %v1839, 0
    %v1860 = vsel %vm680, %v1840, 0
    %v1863 = vsel %vm680, %v1841, 0
    %v1866 = vsel %vm680, %v1842, 0
    %v1869 = vsel %vm680, %v1843, 0
    %v1872 = vsel %vm680, %v1844, 0
    %v1875 = vsel %vm680, %v1845, 0
    %1877 = vmatprep.subr.bf16.mxu0 0
    %1878 = vmatpush1.bf16.xpose.msra.mxu0 %v1854
    %1879 = vmatprep.subr.bf16.mxu0 0
    %1880 = vmatpush1.bf16.xpose.msra.mxu0 %v1857
    %1881 = vmatprep.subr.bf16.mxu0 0
    %1882 = vmatpush1.bf16.xpose.msra.mxu0 %v1860
    %1883 = vmatprep.subr.bf16.mxu0 0
    %1884 = vmatpush1.bf16.xpose.msra.mxu0 %v1863
    %1885 = vmatprep.subr.bf16.mxu0 0
    %1886 = vmatpush1.bf16.xpose.msra.mxu0 %v1866
    %1887 = vmatprep.subr.bf16.mxu0 0
    %1888 = vmatpush1.bf16.xpose.msra.mxu0 %v1869
    %1889 = vmatprep.subr.bf16.mxu0 0
    %1890 = vmatpush1.bf16.xpose.msra.mxu0 %v1872
    %1891 = vmatprep.subr.bf16.mxu0 0
    %1892 = vmatpush1.bf16.xpose.msra.mxu0 %v1875
    %1893 = vmatprep.subr.bf16.mxu0 0
    %1894 = vmatpush1.bf16.xpose.msra.mxu0 0
    %1895 = vmatprep.subr.bf16.mxu0 0
    %1896 = vmatpush1.bf16.xpose.msra.mxu0 0
    %1897 = vmatprep.subr.bf16.mxu0 0
    %1898 = vmatpush1.bf16.xpose.msra.mxu0 0
    %1899 = vmatprep.subr.bf16.mxu0 0
    %1900 = vmatpush1.bf16.xpose.msra.mxu0 0
    %1901 = vmatprep.subr.bf16.mxu0 0
    %1902 = vmatpush1.bf16.xpose.msra.mxu0 0
    %1903 = vmatprep.subr.bf16.mxu0 0
    %1904 = vmatpush1.bf16.xpose.msra.mxu0 0
    %1905 = vmatprep.subr.bf16.mxu0 0
    %1906 = vmatpush1.bf16.xpose.msra.mxu0 0
    %1907 = vmatprep.subr.bf16.mxu0 0
    %1908 = vmatpush1.bf16.xpose.msra.mxu0 0
    %1909 = vmatprep.mubr.bf16.mxu0 0
    %1910 = vmatmul.mubr.bf16.gmra.mrb[0].mxu0 %v1851
    %v1911 = vpop.f32.mrb[0].mxu0
    %v1912 = vadd.f32 %v1849, %v1911
    %v1913 = vpop.f32.mrb[0].mxu0
    %v1914 = vpop.f32.mrb[0].mxu0
    %v1915 = vpop.f32.mrb[0].mxu0
    %1916 = vdwg.mxu0
    %v1917 = vadd.f32 %v1912, %v1836
    %1918 = vst [vmem:[%s22] sm:$0xff] %v1917
    %v1919 = vld [vmem:[%s8] sm:$0xff]
    %1920 = vset.pattern.permute.xlu0 0
    %1921 = vperm.xlu0 %1920, %v1919
    %v1922 = vpop.permute.xlu0 %1921
    %vm1923 = vcmp.eq.s32.totalorder %v144, %v1922
    %v1924 = vsel %vm1923, 1, 0
    %v1925 = vcvt.s32.f32 %v1924
    %1926 = vmax.xlane.f32.xlu0 %v1917
    %v1927 = vpop.xlane.xlu0 %1926
    %v1928 = vsub.f32 %v1917, %v1927
    %v1929 = vmul.f32 %v1928, 1.442695
    %v1930 = vpow.pop %v1929
    %1931 = vadd.xlane.f32.xlu0 %v1930
    %v1932 = vpop.xlane.xlu0 %1931
    %v1933 = vlog2.pop %v1932
    %v1934 = vmul.f32 %v1933, 0.6931472
    %v1935 = vsub.f32 %v1928, %v1934
    %v1936 = vmul.f32 %v1925, %v1935
    %1937 = vadd.xlane.f32.xlu0 %v1936
    %v1938 = vpop.xlane.xlu0 %1937
    %v1939 = vsub.f32 0.0, %v1938
    %vm1940 = vcmask 7168
    %v1941 = vsel %vm1940, %v1939, 0.0
    %1942 = vadd.xlane.f32.xlu0 %v1941
    %v1943 = vpop.xlane.xlu0 %1942
    %v1944 = vrot.slane %v1943, 4
    %v1945 = vadd.f32 %v1943, %v1944
    %v1946 = vrot.slane %v1945, 2
    %v1947 = vadd.f32 %v1945, %v1946
    %v1948 = vrot.slane %v1947, 1
    %v1949 = vadd.f32 %v1947, %v1948
    %s1950 = vtos %v1949
    %v1951 = vstv %s1950
    %v1952 = vrcp.pop 8.0
    %v1953 = vmul.f32 %v1951, %v1952
    %vm1954 = vcmask 0
    %1955 = vst.msk [vmem:[#allocation3] sm:$0x1] %vm1954, %v1953
    // Predicated region
    $region90: #{leopard_forward.1} parent=1 // pred_check
      _
    $region91: #{leopard_forward.1} parent=1 // pred_check_branch
      %1957 = sbr.rel (0) target = $region93
    $region92: #{leopard_forward.1} parent=1 // pred_region
      _
    $region93: #{leopard_forward.1} parent=1 // pred_fallthru
      _
    // Predicated region
    $region94: #{leopard_forward.1} parent=1 // pred_check
      _
    $region95: #{leopard_forward.1} parent=1 // pred_check_branch
      %1959 = sbr.rel (0) target = $region97
    $region96: #{leopard_forward.1} parent=1 // pred_region
      %s1961 = ssub.s32 16, 16
      %1962 = vsyncadd [#allocation4], %s1961
      %s1964 = sshll.u32 [#allocation3], 4
      %s1965 = int_to_ptr.vmem [resolvable:$true] %s1964
      %1967 = dma.vmem_to_hbm [thread:$0]  %s1965, 16, %s23, [#allocation4]
    $region97: #{leopard_forward.1} parent=1 // pred_fallthru
      _
    // Predicated region
    $region98: #{leopard_forward.1} parent=1 // pred_check
      _
    $region99: #{leopard_forward.1} parent=1 // pred_check_branch
      %1969 = sbr.rel (0) target = $region101
    $region100: #{leopard_forward.1} parent=1 // pred_region
      _
    $region101: #{leopard_forward.1} parent=1 // pred_fallthru
      _
    // Predicated region
    $region102: #{leopard_forward.1} parent=1 // pred_check
      _
    $region103: #{leopard_forward.1} parent=1 // pred_check_branch
      %1971 = sbr.rel (0) target = $region105
    $region104: #{leopard_forward.1} parent=1 // pred_region
      %1972 = dma.done [#allocation4], 16
    $region105: #{leopard_forward.1} parent=1 // pred_fallthru
      _
    %1973 = vsyncpa [#allocation4], 1

</llo_original>
